<compile_context>
chip_gen: v6e
topology: v6e:2x2x1
jax: 0.10.0
libtpu: 0.0.40
codegen_flags: <defaults>
</compile_context>

<pallas_src>
import jax
import jax.numpy as jnp
import numpy as np
from jax.experimental import pallas as pl
from jax.experimental.pallas import tpu as pltpu

BN_EPS = 1e-5


# ----------------------------- in-kernel stages ----------------------------- #

def _conv_bn_relu(x, dense_w_bf16, pool_bf16, pool_t_bf16, gamma, beta):
    """Conv2d(3x3,s2,p1) + BatchNorm2d(train) + ReLU on NCHW-flattened rows.

    x:           (N, Cin*Hi*Wi) f32 activations
    dense_w_bf16:(Cin*Hi*Wi, Cout*Ho*Wo) bf16 dense matrix of the strided conv
    pool_bf16:   (Cout*Ho*Wo, Cout) 0/1 column->channel pooling matrix (bf16 exact)
    pool_t_bf16: (Cout, Cout*Ho*Wo) its transpose (channel->column broadcast)
    gamma/beta:  (1, Cout) f32 BN affine parameters
    """
    dense_w = dense_w_bf16.astype(jnp.float32)     # bf16 stored in HBM; f32 math
    pool = pool_bf16.astype(jnp.float32)
    pool_t = pool_t_bf16.astype(jnp.float32)

    y = jnp.dot(x, dense_w, preferred_element_type=jnp.float32)      # (N, Cout*Ho*Wo)

    cout = pool.shape[1]
    spatial = y.shape[1] // cout
    # NOTE: block-local shapes -- only valid with grid=().  If the batch axis is
    # ever tiled, BN stats must become a cross-tile reduction over the GLOBAL N.
    inv_cnt = 1.0 / (y.shape[0] * spatial)

    # ONE pool matmul for both statistics: row 0 = per-column sum, row 1 = sumsq.
    stats = jnp.concatenate(
        [jnp.sum(y, axis=0, keepdims=True),
         jnp.sum(y * y, axis=0, keepdims=True)], axis=0)             # (2, Cout*Ho*Wo)
    stats_c = jnp.dot(stats, pool, preferred_element_type=jnp.float32) * inv_cnt
    mean_c = stats_c[0:1, :]                                         # (1, Cout)
    var_c = jnp.maximum(stats_c[1:2, :] - mean_c * mean_c, 0.0)      # biased var, >= 0

    scale_c = gamma * jax.lax.rsqrt(var_c + BN_EPS)                  # gamma folded in
    shift_c = beta - mean_c * scale_c                                # mean folded in
    # ONE broadcast matmul: (2, Cout) @ pool_t -> (2, Cout*Ho*Wo).
    sb = jnp.dot(jnp.concatenate([scale_c, shift_c], axis=0), pool_t,
                 preferred_element_type=jnp.float32)
    return jnp.maximum(y * sb[0:1, :] + sb[1:2, :], 0.0)             # BN affine + ReLU


def _make_encoder_kernel(num_layers):
    n_late = num_layers - 1

    def kernel(*refs):
        x_ref = refs[0]
        conv_refs = refs[1:1 + 5 * num_layers]
        fcw_hbm = refs[1 + 5 * num_layers]      # HBM (pl.ANY) ref, copied manually
        fcb_ref = refs[2 + 5 * num_layers]
        o_ref = refs[3 + 5 * num_layers]
        scratch = refs[4 + 5 * num_layers:]
        d_bufs = scratch[:n_late]               # VMEM buffers for layer>=1 dense
        fcw_buf = scratch[n_late]
        sems = scratch[n_late + 1]

        # Kick off HBM->VMEM DMA of later-layer conv matrices and fc weights so
        # they copy in behind layer-0's compute.
        copies = []
        for i in range(n_late):
            cp = pltpu.make_async_copy(conv_refs[5 * (i + 1)], d_bufs[i], sems.at[i])
            cp.start()
            copies.append(cp)
        cp_fc = pltpu.make_async_copy(fcw_hbm, fcw_buf, sems.at[n_late])
        cp_fc.start()

        h = x_ref[...]                                               # (N, 1*H*W) f32
        for l in range(num_layers):
            if l == 0:
                d = conv_refs[0][...]
            else:
                copies[l - 1].wait()
                d = d_bufs[l - 1][...]
            _, p, pt, g, b = conv_refs[5 * l:5 * l + 5]
            h = _conv_bn_relu(h, d, p[...], pt[...], g[...], b[...])

        # Flatten is a no-op (columns already in PyTorch (c, h, w) order).
        cp_fc.wait()
        o_ref[...] = (jnp.dot(h, fcw_buf[...].astype(jnp.float32),
                              preferred_element_type=jnp.float32) + fcb_ref[...])

    return kernel


# --------------------- host-side, one-time parameter prep ------------------- #

def _conv3x3_s2_p1_dense(w_oihw, hi, wi):
    """Dense (Cin*Hi*Wi, Cout*Ho*Wo) matrix of Conv2d(k=3, s=2, p=1), NCHW order."""
    w = np.asarray(w_oihw, np.float32)
    cout, cin, _, _ = w.shape
    ho = (hi + 2 - 3) // 2 + 1
    wo = (wi + 2 - 3) // 2 + 1
    d = np.zeros((cin * hi * wi, cout * ho * wo), np.float32)
    for oc in range(cout):
        for oh in range(ho):
            for ow in range(wo):
                col = (oc * ho + oh) * wo + ow
                for ic in range(cin):
                    for kh in range(3):
                        ih = 2 * oh - 1 + kh
                        if ih < 0 or ih >= hi:
                            continue
                        for kw in range(3):
                            iw = 2 * ow - 1 + kw
                            if iw < 0 or iw >= wi:
                                continue
                            d[(ic * hi + ih) * wi + iw, col] = w[oc, ic, kh, kw]
    return d, ho, wo


def _channel_pool(cout, spatial):
    """0/1 matrix mapping flattened (c, h, w) columns -> channel c."""
    return np.kron(np.eye(cout, dtype=np.float32),
                   np.ones((spatial, 1), np.float32))                # (cout*spatial, cout)


def init_params(key, hidden_dims, latent_dim, num_categories):
    """Random parameters in the PyTorch layouts of `Encoder`.

    Conv/fc weights are rounded to bf16-representable values so the bf16 packing
    used by the kernel is lossless and the reference uses identical numbers.
    """
    def bf16_round(a):
        return a.astype(jnp.bfloat16).astype(jnp.float32)

    params = {"conv_w": [], "bn": []}
    chans = [1] + list(hidden_dims)
    for cin, cout in zip(chans[:-1], chans[1:]):
        key, kw, kg, kb = jax.random.split(key, 4)
        w = bf16_round(jax.random.normal(kw, (cout, cin, 3, 3), jnp.float32)
                       / np.sqrt(cin * 9))
        # Conv2d bias omitted on purpose: with train-mode BatchNorm right after
        # the conv, a per-channel bias is cancelled exactly by the batch-mean
        # subtraction and cannot affect the forward output.
        gamma = 1.0 + 0.1 * jax.random.normal(kg, (1, cout), jnp.float32)
        beta = 0.1 * jax.random.normal(kb, (1, cout), jnp.float32)
        params["conv_w"].append(w)
        params["bn"].append((gamma, beta))
    in_feat = hidden_dims[-1] * 16        # two stride-2 convs: 16x16 -> 8x8 -> 4x4
    out_feat = num_categories * latent_dim
    key, k1, k2 = jax.random.split(key, 3)
    params["fc_w"] = bf16_round(jax.random.normal(k1, (out_feat, in_feat), jnp.float32)
                                / np.sqrt(in_feat))
    params["fc_b"] = 0.05 * jax.random.normal(k2, (1, out_feat), jnp.float32)
    return params


def prepare_operands(params, hi, wi):
    """Build the fused kernel's constant operands (weights-only preprocessing)."""
    ops = []
    for w, (gamma, beta) in zip(params["conv_w"], params["bn"]):
        d, ho, wo = _conv3x3_s2_p1_dense(w, hi, wi)
        pool = _channel_pool(w.shape[0], ho * wo)
        ops.append((jnp.asarray(d, jnp.bfloat16),                    # exact: w is bf16-repr.
                    jnp.asarray(pool, jnp.bfloat16),                 # exact 0/1
                    jnp.asarray(np.ascontiguousarray(pool.T), jnp.bfloat16),
                    gamma.astype(jnp.float32), beta.astype(jnp.float32)))
        hi, wi = ho, wo

    fc_w_t = np.asarray(params["fc_w"], np.float32).T                # (F_in, F_out)
    out_feat = fc_w_t.shape[1]
    out_pad = max(128, -(-out_feat // 128) * 128)                    # lane-dense output
    fc_w_pad = np.zeros((fc_w_t.shape[0], out_pad), np.float32)
    fc_w_pad[:, :out_feat] = fc_w_t
    fc_b_pad = np.zeros((1, out_pad), np.float32)
    fc_b_pad[:, :out_feat] = np.asarray(params["fc_b"], np.float32)
    return ops, jnp.asarray(fc_w_pad, jnp.bfloat16), jnp.asarray(fc_b_pad), out_feat


# ------------------------------ forward pass -------------------------------- #

def _vmem_spec():
    return pl.BlockSpec(memory_space=pltpu.MemorySpace.VMEM)


def encoder_forward(x_nchw, ops, fc_w, fc_b, out_feat, latent_dim, num_categories):
    n = x_nchw.shape[0]
    x_rows = x_nchw.astype(jnp.float32).reshape(n, -1)    # NCHW flatten (free reshape)
    num_layers = len(ops)
    n_late = num_layers - 1

    inputs = [x_rows]
    in_specs = [_vmem_spec()]
    for l, (d, p, pt, g, b) in enumerate(ops):
        inputs += [d, p, pt, g, b]
        # Layer-0 dense goes straight to VMEM (needed immediately); later layers'
        # dense matrices stay in HBM and are DMA'd manually inside the kernel.
        d_spec = _vmem_spec() if l == 0 else pl.BlockSpec(memory_space=pl.ANY)
        in_specs += [d_spec, _vmem_spec(), _vmem_spec(), _vmem_spec(), _vmem_spec()]
    inputs += [fc_w, fc_b]
    in_specs += [pl.BlockSpec(memory_space=pl.ANY), _vmem_spec()]

    scratch_shapes = [pltpu.VMEM(ops[l][0].shape, jnp.bfloat16)
                      for l in range(1, num_layers)]
    scratch_shapes += [pltpu.VMEM(fc_w.shape, jnp.bfloat16),
                       pltpu.SemaphoreType.DMA((n_late + 1,))]

    out_pad = fc_w.shape[1]
    z = pl.pallas_call(
        _make_encoder_kernel(num_layers),
        out_shape=jax.ShapeDtypeStruct((n, out_pad), jnp.float32),
        in_specs=in_specs,
        out_specs=_vmem_spec(),
        scratch_shapes=scratch_shapes,
        compiler_params=pltpu.CompilerParams(vmem_limit_bytes=8 * 1024 * 1024),
    )(*inputs)
    return z[:, :out_feat].reshape(-1, latent_dim, num_categories)   # x.view(-1, L, K)


def reference_forward(x_nchw, params, latent_dim, num_categories):
    """Pure-JAX/XLA reference mirroring the PyTorch module in train() mode."""
    h = x_nchw.astype(jnp.float32)
    for w, (gamma, beta) in zip(params["conv_w"], params["bn"]):
        h = jax.lax.conv_general_dilated(
            h, w, window_strides=(2, 2), padding=((1, 1), (1, 1)),
            dimension_numbers=("NCHW", "OIHW", "NCHW"),
            precision=jax.lax.Precision.HIGHEST)
        mean = jnp.mean(h, axis=(0, 2, 3), keepdims=True)
        var = jnp.mean(jnp.square(h - mean), axis=(0, 2, 3), keepdims=True)   # biased
        h = (h - mean) * jax.lax.rsqrt(var + BN_EPS)
        h = h * gamma.reshape(1, -1, 1, 1) + beta.reshape(1, -1, 1, 1)
        h = jnp.maximum(h, 0.0)
    flat = h.reshape(h.shape[0], -1)
    z = jnp.dot(flat, params["fc_w"].T,
                precision=jax.lax.Precision.HIGHEST) + params["fc_b"]
    return z.reshape(-1, latent_dim, num_categories)


# ---------------------------------- main ------------------------------------ #

if __name__ == "__main__":
    latent_dim = 4
    num_categories = 6
    hidden_dims = [8, 16]                 # 16x16 -> 8x8 -> 4x4

    key = jax.random.PRNGKey(0)
    kx, kp = jax.random.split(key)
    # batch=2 keeps most sublanes / MXU rows idle; for throughput, batch >= 128
    # per pallas_call is the biggest available lever (see header notes).
    x = jax.random.normal(kx, (2, 1, 16, 16), jnp.float32)   # NCHW, in_channels=1
    params = init_params(kp, hidden_dims, latent_dim, num_categories)
    ops, fc_w, fc_b, out_feat = prepare_operands(params, 16, 16)

    fwd = jax.jit(lambda inp: encoder_forward(inp, ops, fc_w, fc_b, out_feat,
                                              latent_dim, num_categories))
    out = fwd(x)
    jax.block_until_ready(out)

    assert out.shape == (2, latent_dim, num_categories), out.shape
    assert out.dtype == jnp.float32

    # Kernel and reference use identical (bf16-representable) weights; remaining
    # deltas are matmul precision schemes (Mosaic MXU vs XLA HIGHEST) and the
    # E[y^2]-mean^2 variance folding, so a 1e-2 bound is comfortable.
    ref = reference_forward(x, params, latent_dim, num_categories)
    np.testing.assert_allclose(np.asarray(out), np.asarray(ref), rtol=1e-2, atol=1e-2)

    print("KERNEL_OK")
</pallas_src>

<mosaic_0001>
module attributes {stable_mosaic.version = 11 : i64} {
  func.func @kernel(%arg0: memref<2x256xf32, #tpu.memory_space<vmem>>, %arg1: memref<256x512xbf16, #tpu.memory_space<vmem>>, %arg2: memref<512x8xbf16, #tpu.memory_space<vmem>>, %arg3: memref<8x512xbf16, #tpu.memory_space<vmem>>, %arg4: memref<1x8xf32, #tpu.memory_space<vmem>>, %arg5: memref<1x8xf32, #tpu.memory_space<vmem>>, %arg6: memref<512x256xbf16, #tpu.memory_space<any>>, %arg7: memref<256x16xbf16, #tpu.memory_space<vmem>>, %arg8: memref<16x256xbf16, #tpu.memory_space<vmem>>, %arg9: memref<1x16xf32, #tpu.memory_space<vmem>>, %arg10: memref<1x16xf32, #tpu.memory_space<vmem>>, %arg11: memref<256x128xbf16, #tpu.memory_space<any>>, %arg12: memref<1x128xf32, #tpu.memory_space<vmem>>, %arg13: memref<2x128xf32, #tpu.memory_space<vmem>>, %arg14: memref<512x256xbf16, #tpu.memory_space<vmem>>, %arg15: memref<256x128xbf16, #tpu.memory_space<vmem>>, %arg16: memref<2x!tpu.dma_semaphore, #tpu.memory_space<semaphore_mem>>) attributes {dimension_semantics = [], scalar_prefetch = 0 : i64, scratch_operands = 3 : i64, tpu.core_type = #tpu.core_type<tc>} {
    %c0_i32 = arith.constant 0 : i32
    %0 = tpu.memref_slice %arg16[%c0_i32] : memref<2x!tpu.dma_semaphore, #tpu.memory_space<semaphore_mem>> -> memref<1x!tpu.dma_semaphore, #tpu.memory_space<semaphore_mem>>
    %1 = tpu.memref_squeeze %0 : memref<1x!tpu.dma_semaphore, #tpu.memory_space<semaphore_mem>> -> memref<!tpu.dma_semaphore, #tpu.memory_space<semaphore_mem>>
    tpu.enqueue_dma source(%arg6 : memref<512x256xbf16, #tpu.memory_space<any>>) target(%arg14 : memref<512x256xbf16, #tpu.memory_space<vmem>>) target_semaphore(%1 : memref<!tpu.dma_semaphore, #tpu.memory_space<semaphore_mem>>)
    %c1_i32 = arith.constant 1 : i32
    %2 = tpu.memref_slice %arg16[%c1_i32] : memref<2x!tpu.dma_semaphore, #tpu.memory_space<semaphore_mem>> -> memref<1x!tpu.dma_semaphore, #tpu.memory_space<semaphore_mem>>
    %3 = tpu.memref_squeeze %2 : memref<1x!tpu.dma_semaphore, #tpu.memory_space<semaphore_mem>> -> memref<!tpu.dma_semaphore, #tpu.memory_space<semaphore_mem>>
    tpu.enqueue_dma source(%arg11 : memref<256x128xbf16, #tpu.memory_space<any>>) target(%arg15 : memref<256x128xbf16, #tpu.memory_space<vmem>>) target_semaphore(%3 : memref<!tpu.dma_semaphore, #tpu.memory_space<semaphore_mem>>)
    %c0 = arith.constant 0 : index
    %c0_0 = arith.constant 0 : index
    %4 = vector.load %arg0[%c0, %c0_0] : memref<2x256xf32, #tpu.memory_space<vmem>>, vector<2x256xf32>
    %c0_1 = arith.constant 0 : index
    %c0_2 = arith.constant 0 : index
    %5 = vector.load %arg1[%c0_1, %c0_2] : memref<256x512xbf16, #tpu.memory_space<vmem>>, vector<256x512xbf16>
    %c0_3 = arith.constant 0 : index
    %c0_4 = arith.constant 0 : index
    %6 = vector.load %arg2[%c0_3, %c0_4] : memref<512x8xbf16, #tpu.memory_space<vmem>>, vector<512x8xbf16>
    %c0_5 = arith.constant 0 : index
    %c0_6 = arith.constant 0 : index
    %7 = vector.load %arg3[%c0_5, %c0_6] : memref<8x512xbf16, #tpu.memory_space<vmem>>, vector<8x512xbf16>
    %c0_7 = arith.constant 0 : index
    %c0_8 = arith.constant 0 : index
    %8 = vector.load %arg4[%c0_7, %c0_8] : memref<1x8xf32, #tpu.memory_space<vmem>>, vector<1x8xf32>
    %c0_9 = arith.constant 0 : index
    %c0_10 = arith.constant 0 : index
    %9 = vector.load %arg5[%c0_9, %c0_10] : memref<1x8xf32, #tpu.memory_space<vmem>>, vector<1x8xf32>
    %10 = arith.extf %5 : vector<256x512xbf16> to vector<256x512xf32>
    %11 = arith.extf %6 : vector<512x8xbf16> to vector<512x8xf32>
    %12 = arith.extf %7 : vector<8x512xbf16> to vector<8x512xf32>
    %cst = arith.constant dense<0.000000e+00> : vector<2x512xf32>
    %13 = tpu.matmul %4, %10, %cst {dimension_numbers = #tpu.dot_dimension_numbers<[1], [0], [0], [1], [0, 0, 1, 1], [], []>} : vector<2x256xf32>, vector<256x512xf32>, vector<2x512xf32> -> vector<2x512xf32>
    %cst_11 = arith.constant dense<0.000000e+00> : vector<512xf32>
    %14 = vector.multi_reduction <add>, %13, %cst_11 [0] : vector<2x512xf32> to vector<512xf32>
    %15 = vector.shape_cast %14 : vector<512xf32> to vector<1x512xf32>
    %16 = arith.mulf %13, %13 : vector<2x512xf32>
    %cst_12 = arith.constant dense<0.000000e+00> : vector<512xf32>
    %17 = vector.multi_reduction <add>, %16, %cst_12 [0] : vector<2x512xf32> to vector<512xf32>
    %18 = vector.shape_cast %17 : vector<512xf32> to vector<1x512xf32>
    %19 = tpu.concatenate %15, %18 in 0 : vector<1x512xf32>, vector<1x512xf32> -> vector<2x512xf32>
    %cst_13 = arith.constant dense<0.000000e+00> : vector<2x8xf32>
    %20 = tpu.matmul %19, %11, %cst_13 {dimension_numbers = #tpu.dot_dimension_numbers<[1], [0], [0], [1], [0, 0, 1, 1], [], []>} : vector<2x512xf32>, vector<512x8xf32>, vector<2x8xf32> -> vector<2x8xf32>
    %cst_14 = arith.constant 7.812500e-03 : f32
    %21 = vector.broadcast %cst_14 : f32 to vector<2x8xf32>
    %22 = arith.mulf %20, %21 : vector<2x8xf32>
    %23 = vector.extract_strided_slice %22 {offsets = [0, 0], sizes = [1, 8], strides = [1, 1]} : vector<2x8xf32> to vector<1x8xf32>
    %24 = vector.extract_strided_slice %22 {offsets = [1, 0], sizes = [1, 8], strides = [1, 1]} : vector<2x8xf32> to vector<1x8xf32>
    %25 = arith.mulf %23, %23 : vector<1x8xf32>
    %26 = arith.subf %24, %25 : vector<1x8xf32>
    %cst_15 = arith.constant 0.000000e+00 : f32
    %27 = vector.broadcast %cst_15 : f32 to vector<1x8xf32>
    %28 = arith.maximumf %26, %27 : vector<1x8xf32>
    %cst_16 = arith.constant 9.99999974E-6 : f32
    %29 = vector.broadcast %cst_16 : f32 to vector<1x8xf32>
    %30 = arith.addf %28, %29 : vector<1x8xf32>
    %31 = math.rsqrt %30 : vector<1x8xf32>
    %32 = arith.mulf %8, %31 : vector<1x8xf32>
    %33 = arith.mulf %23, %32 : vector<1x8xf32>
    %34 = arith.subf %9, %33 : vector<1x8xf32>
    %35 = tpu.concatenate %32, %34 in 0 : vector<1x8xf32>, vector<1x8xf32> -> vector<2x8xf32>
    %cst_17 = arith.constant dense<0.000000e+00> : vector<2x512xf32>
    %36 = tpu.matmul %35, %12, %cst_17 {dimension_numbers = #tpu.dot_dimension_numbers<[1], [0], [0], [1], [0, 0, 1, 1], [], []>} : vector<2x8xf32>, vector<8x512xf32>, vector<2x512xf32> -> vector<2x512xf32>
    %37 = vector.extract_strided_slice %36 {offsets = [0, 0], sizes = [1, 512], strides = [1, 1]} : vector<2x512xf32> to vector<1x512xf32>
    %38 = vector.broadcast %37 : vector<1x512xf32> to vector<2x512xf32>
    %39 = arith.mulf %13, %38 : vector<2x512xf32>
    %40 = vector.extract_strided_slice %36 {offsets = [1, 0], sizes = [1, 512], strides = [1, 1]} : vector<2x512xf32> to vector<1x512xf32>
    %41 = vector.broadcast %40 : vector<1x512xf32> to vector<2x512xf32>
    %42 = arith.addf %39, %41 : vector<2x512xf32>
    %cst_18 = arith.constant 0.000000e+00 : f32
    %43 = vector.broadcast %cst_18 : f32 to vector<2x512xf32>
    %44 = arith.maximumf %42, %43 : vector<2x512xf32>
    %c0_i32_19 = arith.constant 0 : i32
    %45 = tpu.memref_slice %arg16[%c0_i32_19] : memref<2x!tpu.dma_semaphore, #tpu.memory_space<semaphore_mem>> -> memref<1x!tpu.dma_semaphore, #tpu.memory_space<semaphore_mem>>
    %46 = tpu.memref_squeeze %45 : memref<1x!tpu.dma_semaphore, #tpu.memory_space<semaphore_mem>> -> memref<!tpu.dma_semaphore, #tpu.memory_space<semaphore_mem>>
    tpu.wait_dma2 semaphore(%46 : memref<!tpu.dma_semaphore, #tpu.memory_space<semaphore_mem>>) src(%arg6 : memref<512x256xbf16, #tpu.memory_space<any>>) dst(%arg14 : memref<512x256xbf16, #tpu.memory_space<vmem>>)
    %c0_20 = arith.constant 0 : index
    %c0_21 = arith.constant 0 : index
    %47 = vector.load %arg14[%c0_20, %c0_21] : memref<512x256xbf16, #tpu.memory_space<vmem>>, vector<512x256xbf16>
    %c0_22 = arith.constant 0 : index
    %c0_23 = arith.constant 0 : index
    %48 = vector.load %arg7[%c0_22, %c0_23] : memref<256x16xbf16, #tpu.memory_space<vmem>>, vector<256x16xbf16>
    %c0_24 = arith.constant 0 : index
    %c0_25 = arith.constant 0 : index
    %49 = vector.load %arg8[%c0_24, %c0_25] : memref<16x256xbf16, #tpu.memory_space<vmem>>, vector<16x256xbf16>
    %c0_26 = arith.constant 0 : index
    %c0_27 = arith.constant 0 : index
    %50 = vector.load %arg9[%c0_26, %c0_27] : memref<1x16xf32, #tpu.memory_space<vmem>>, vector<1x16xf32>
    %c0_28 = arith.constant 0 : index
    %c0_29 = arith.constant 0 : index
    %51 = vector.load %arg10[%c0_28, %c0_29] : memref<1x16xf32, #tpu.memory_space<vmem>>, vector<1x16xf32>
    %52 = arith.extf %47 : vector<512x256xbf16> to vector<512x256xf32>
    %53 = arith.extf %48 : vector<256x16xbf16> to vector<256x16xf32>
    %54 = arith.extf %49 : vector<16x256xbf16> to vector<16x256xf32>
    %cst_30 = arith.constant dense<0.000000e+00> : vector<2x256xf32>
    %55 = tpu.matmul %44, %52, %cst_30 {dimension_numbers = #tpu.dot_dimension_numbers<[1], [0], [0], [1], [0, 0, 1, 1], [], []>} : vector<2x512xf32>, vector<512x256xf32>, vector<2x256xf32> -> vector<2x256xf32>
    %cst_31 = arith.constant dense<0.000000e+00> : vector<256xf32>
    %56 = vector.multi_reduction <add>, %55, %cst_31 [0] : vector<2x256xf32> to vector<256xf32>
    %57 = vector.shape_cast %56 : vector<256xf32> to vector<1x256xf32>
    %58 = arith.mulf %55, %55 : vector<2x256xf32>
    %cst_32 = arith.constant dense<0.000000e+00> : vector<256xf32>
    %59 = vector.multi_reduction <add>, %58, %cst_32 [0] : vector<2x256xf32> to vector<256xf32>
    %60 = vector.shape_cast %59 : vector<256xf32> to vector<1x256xf32>
    %61 = tpu.concatenate %57, %60 in 0 : vector<1x256xf32>, vector<1x256xf32> -> vector<2x256xf32>
    %cst_33 = arith.constant dense<0.000000e+00> : vector<2x16xf32>
    %62 = tpu.matmul %61, %53, %cst_33 {dimension_numbers = #tpu.dot_dimension_numbers<[1], [0], [0], [1], [0, 0, 1, 1], [], []>} : vector<2x256xf32>, vector<256x16xf32>, vector<2x16xf32> -> vector<2x16xf32>
    %cst_34 = arith.constant 3.125000e-02 : f32
    %63 = vector.broadcast %cst_34 : f32 to vector<2x16xf32>
    %64 = arith.mulf %62, %63 : vector<2x16xf32>
    %65 = vector.extract_strided_slice %64 {offsets = [0, 0], sizes = [1, 16], strides = [1, 1]} : vector<2x16xf32> to vector<1x16xf32>
    %66 = vector.extract_strided_slice %64 {offsets = [1, 0], sizes = [1, 16], strides = [1, 1]} : vector<2x16xf32> to vector<1x16xf32>
    %67 = arith.mulf %65, %65 : vector<1x16xf32>
    %68 = arith.subf %66, %67 : vector<1x16xf32>
    %cst_35 = arith.constant 0.000000e+00 : f32
    %69 = vector.broadcast %cst_35 : f32 to vector<1x16xf32>
    %70 = arith.maximumf %68, %69 : vector<1x16xf32>
    %cst_36 = arith.constant 9.99999974E-6 : f32
    %71 = vector.broadcast %cst_36 : f32 to vector<1x16xf32>
    %72 = arith.addf %70, %71 : vector<1x16xf32>
    %73 = math.rsqrt %72 : vector<1x16xf32>
    %74 = arith.mulf %50, %73 : vector<1x16xf32>
    %75 = arith.mulf %65, %74 : vector<1x16xf32>
    %76 = arith.subf %51, %75 : vector<1x16xf32>
    %77 = tpu.concatenate %74, %76 in 0 : vector<1x16xf32>, vector<1x16xf32> -> vector<2x16xf32>
    %cst_37 = arith.constant dense<0.000000e+00> : vector<2x256xf32>
    %78 = tpu.matmul %77, %54, %cst_37 {dimension_numbers = #tpu.dot_dimension_numbers<[1], [0], [0], [1], [0, 0, 1, 1], [], []>} : vector<2x16xf32>, vector<16x256xf32>, vector<2x256xf32> -> vector<2x256xf32>
    %79 = vector.extract_strided_slice %78 {offsets = [0, 0], sizes = [1, 256], strides = [1, 1]} : vector<2x256xf32> to vector<1x256xf32>
    %80 = vector.broadcast %79 : vector<1x256xf32> to vector<2x256xf32>
    %81 = arith.mulf %55, %80 : vector<2x256xf32>
    %82 = vector.extract_strided_slice %78 {offsets = [1, 0], sizes = [1, 256], strides = [1, 1]} : vector<2x256xf32> to vector<1x256xf32>
    %83 = vector.broadcast %82 : vector<1x256xf32> to vector<2x256xf32>
    %84 = arith.addf %81, %83 : vector<2x256xf32>
    %cst_38 = arith.constant 0.000000e+00 : f32
    %85 = vector.broadcast %cst_38 : f32 to vector<2x256xf32>
    %86 = arith.maximumf %84, %85 : vector<2x256xf32>
    %c1_i32_39 = arith.constant 1 : i32
    %87 = tpu.memref_slice %arg16[%c1_i32_39] : memref<2x!tpu.dma_semaphore, #tpu.memory_space<semaphore_mem>> -> memref<1x!tpu.dma_semaphore, #tpu.memory_space<semaphore_mem>>
    %88 = tpu.memref_squeeze %87 : memref<1x!tpu.dma_semaphore, #tpu.memory_space<semaphore_mem>> -> memref<!tpu.dma_semaphore, #tpu.memory_space<semaphore_mem>>
    tpu.wait_dma2 semaphore(%88 : memref<!tpu.dma_semaphore, #tpu.memory_space<semaphore_mem>>) src(%arg11 : memref<256x128xbf16, #tpu.memory_space<any>>) dst(%arg15 : memref<256x128xbf16, #tpu.memory_space<vmem>>)
    %c0_40 = arith.constant 0 : index
    %c0_41 = arith.constant 0 : index
    %89 = vector.load %arg15[%c0_40, %c0_41] : memref<256x128xbf16, #tpu.memory_space<vmem>>, vector<256x128xbf16>
    %90 = arith.extf %89 : vector<256x128xbf16> to vector<256x128xf32>
    %cst_42 = arith.constant dense<0.000000e+00> : vector<2x128xf32>
    %91 = tpu.matmul %86, %90, %cst_42 {dimension_numbers = #tpu.dot_dimension_numbers<[1], [0], [0], [1], [0, 0, 1, 1], [], []>} : vector<2x256xf32>, vector<256x128xf32>, vector<2x128xf32> -> vector<2x128xf32>
    %c0_43 = arith.constant 0 : index
    %c0_44 = arith.constant 0 : index
    %92 = vector.load %arg12[%c0_43, %c0_44] : memref<1x128xf32, #tpu.memory_space<vmem>>, vector<1x128xf32>
    %93 = vector.broadcast %92 : vector<1x128xf32> to vector<2x128xf32>
    %94 = arith.addf %91, %93 : vector<2x128xf32>
    %c0_45 = arith.constant 0 : index
    %c0_46 = arith.constant 0 : index
    %95 = vector.load %arg13[%c0_45, %c0_46] : memref<2x128xf32, #tpu.memory_space<vmem>>, vector<2x128xf32>
    tpu.vector_store %arg13[%c0_45, %c0_46], %94 {strides = array<i32>} : memref<2x128xf32, #tpu.memory_space<vmem>>, vector<2x128xf32>,
    return
  }
}

</mosaic_0001>

<llo_original>
// kernel: _lambda_.1
$region0: #{_lambda_.1}
  #allocation0 [shape = 'u32[]', space=smem, size = 0x4, offset = 0x4, fixed_abs, tag = 'smem constant byte address 0x4 - core index']
  #allocation1 [shape = 'u32[144,128]{1,0:T(1,128)}', space=vmem, size = 0x12000, scoped, tag = 'internal scratch']
  #allocation2 [shape = 'bf16[512,256]{1,0:T(8,128)(2,1)}', space=vmem, size = 0x40000, scoped, tag = 'scratch operand']
  #allocation3 [shape = 'bf16[256,128]{1,0:T(8,128)(2,1)}', space=vmem, size = 0x10000, scoped, tag = 'scratch operand']
  #allocation4 [shape = 's32[2]{0}', space=sflag, size = 0x8, scoped, tag = 'scratch operand']
  #allocation10 [shape = 's32[]', space=sflag, size = 0x4, offset = 0, fixed_abs, tag = 'sflag constant byte address 0x0 - dummy sync flag']
  #allocation11 [shape = 's32[]', space=sflag, size = 0x4, offset = 0, fixed_abs, tag = 'sflag constant byte address 0x0 - dummy sync flag']
  #allocation12 [shape = 'u32[]', space=smem, size = 0x4, offset = 0x44, fixed_abs, tag = 'smem constant byte address 0x44 - assertion arg 0']
  #allocation13 [shape = 'u32[]', space=smem, size = 0x4, offset = 0x48, fixed_abs, tag = 'smem constant byte address 0x48 - assertion arg 1']
  #allocation14 [shape = 's32[]', space=sflag, size = 0x4, offset = 0, fixed_abs, tag = 'sflag constant byte address 0x0 - dummy sync flag']
  #allocation15 [shape = 's32[]', space=sflag, size = 0x4, offset = 0, fixed_abs, tag = 'sflag constant byte address 0x0 - dummy sync flag']
  %s0 = inlined_call_operand.vmem [shape: f32[2,256], index: 0, kind: input, shape index: {}]
  %s1 = inlined_call_operand.hbm [shape: bf16[256,512], index: 1, kind: input, shape index: {}]
  %s2 = inlined_call_operand.hbm [shape: bf16[512,8], index: 2, kind: input, shape index: {}]
  %s3 = inlined_call_operand.vmem [shape: bf16[8,512], index: 3, kind: input, shape index: {}]
  %s4 = inlined_call_operand.vmem [shape: f32[1,8], index: 4, kind: input, shape index: {}]
  %s5 = inlined_call_operand.vmem [shape: f32[1,8], index: 5, kind: input, shape index: {}]
  %s6 = inlined_call_operand.hbm [shape: bf16[512,256], index: 6, kind: input, shape index: {}]
  %s7 = inlined_call_operand.hbm [shape: bf16[256,16], index: 7, kind: input, shape index: {}]
  %s8 = inlined_call_operand.vmem [shape: bf16[16,256], index: 8, kind: input, shape index: {}]
  %s9 = inlined_call_operand.vmem [shape: f32[1,16], index: 9, kind: input, shape index: {}]
  %s10 = inlined_call_operand.vmem [shape: f32[1,16], index: 10, kind: input, shape index: {}]
  %s11 = inlined_call_operand.hbm [shape: bf16[256,128], index: 11, kind: input, shape index: {}]
  %s12 = inlined_call_operand.vmem [shape: f32[1,128], index: 12, kind: input, shape index: {}]
  %s13 = inlined_call_operand.vmem [shape: f32[2,128], index: 13, kind: output, shape index: {}]
  %s14 = sld [smem:[#allocation0]]
  $region74: #{_lambda_.1} parent=0
    _
  %s16 = ssub.s32 1, %s14
  %s17 = scalar_select 0, %s16, %s14
  $region1: #{_lambda_.1} parent=0
    #allocation5 [shape = 'u8[262144]{0}', space=vmem, size = 0x40000, scoped, tag = 'input window, operand 1, single buffered']
    #allocation6 [shape = 's32[1]{0}', space=sflag, size = 0x4, scoped, tag = 'scoped memory for _lambda_.1']
    #allocation7 [shape = 'u8[131072]{0}', space=vmem, size = 0x20000, scoped, tag = 'input window, operand 2, single buffered']
    #allocation8 [shape = 's32[1]{0}', space=sflag, size = 0x4, scoped, tag = 'scoped memory for _lambda_.1']
    #allocation9 [shape = 'u8[65536]{0}', space=vmem, size = 0x10000, scoped, tag = 'input window, operand 7, single buffered']
    %18 = vsyncpa [#allocation6], 0
    %19 = vsyncpa [#allocation8], 0
    // Predicated region
    $region2: #{_lambda_.1} parent=1 // pred_check
      _
    $region3: #{_lambda_.1} parent=1 // pred_check_branch
      %21 = sbr.rel (0) target = $region5
    $region4: #{_lambda_.1} parent=1 // pred_region
      _
    $region5: #{_lambda_.1} parent=1 // pred_fallthru
      _
    // Predicated region
    $region6: #{_lambda_.1} parent=1 // pred_check
      _
    $region7: #{_lambda_.1} parent=1 // pred_check_branch
      %23 = sbr.rel (0) target = $region9
    $region8: #{_lambda_.1} parent=1 // pred_region
      %s25 = ssub.s32 8192, 8192
      %26 = vsyncadd [#allocation6], %s25
      %s27 = sshll.u32 [#allocation5], 4
      %s28 = int_to_ptr.vmem [resolvable:$true] %s27
      %33 = dma.hbm_to_vmem [thread:$0]  %s1, 8192, %s28, [#allocation6], 256, 256, 16
    $region9: #{_lambda_.1} parent=1 // pred_fallthru
      _
    // Predicated region
    $region10: #{_lambda_.1} parent=1 // pred_check
      _
    $region11: #{_lambda_.1} parent=1 // pred_check_branch
      %35 = sbr.rel (0) target = $region13
    $region12: #{_lambda_.1} parent=1 // pred_region
      %s37 = ssub.s32 4096, 4096
      %38 = vsyncadd [#allocation8], %s37
      %s39 = sshll.u32 [#allocation7], 4
      %s40 = int_to_ptr.vmem [resolvable:$true] %s39
      %45 = dma.hbm_to_vmem [thread:$0]  %s2, 4096, %s40, [#allocation8], 64, 64, 4
    $region13: #{_lambda_.1} parent=1 // pred_fallthru
      _
    // Predicated region
    $region14: #{_lambda_.1} parent=1 // pred_check
      _
    $region15: #{_lambda_.1} parent=1 // pred_check_branch
      %47 = sbr.rel (0) target = $region17
    $region16: #{_lambda_.1} parent=1 // pred_region
      _
    $region17: #{_lambda_.1} parent=1 // pred_fallthru
      _
    // Predicated region
    $region18: #{_lambda_.1} parent=1 // pred_check
      _
    $region19: #{_lambda_.1} parent=1 // pred_check_branch
      %49 = sbr.rel (0) target = $region21
    $region20: #{_lambda_.1} parent=1 // pred_region
      _
    $region21: #{_lambda_.1} parent=1 // pred_fallthru
      _
    // Predicated region
    $region22: #{_lambda_.1} parent=1 // pred_check
      _
    $region23: #{_lambda_.1} parent=1 // pred_check_branch
      %51 = sbr.rel (0) target = $region25
    $region24: #{_lambda_.1} parent=1 // pred_region
      _
    $region25: #{_lambda_.1} parent=1 // pred_fallthru
      _
    // Predicated region
    $region26: #{_lambda_.1} parent=1 // pred_check
      _
    $region27: #{_lambda_.1} parent=1 // pred_check_branch
      %53 = sbr.rel (0) target = $region29
    $region28: #{_lambda_.1} parent=1 // pred_region
      %s55 = ssub.s32 2048, 2048
      %56 = vsyncadd [#allocation8], %s55
      %s57 = sshll.u32 [#allocation9], 4
      %s58 = int_to_ptr.vmem [resolvable:$true] %s57
      %63 = dma.hbm_to_vmem [thread:$0]  %s7, 2048, %s58, [#allocation8], 64, 64, 4
    $region29: #{_lambda_.1} parent=1 // pred_fallthru
      _
    // Predicated region
    $region30: #{_lambda_.1} parent=1 // pred_check
      _
    $region31: #{_lambda_.1} parent=1 // pred_check_branch
      %65 = sbr.rel (0) target = $region33
    $region32: #{_lambda_.1} parent=1 // pred_region
      _
    $region33: #{_lambda_.1} parent=1 // pred_fallthru
      _
    // Predicated region
    $region34: #{_lambda_.1} parent=1 // pred_check
      _
    $region35: #{_lambda_.1} parent=1 // pred_check_branch
      %67 = sbr.rel (0) target = $region37
    $region36: #{_lambda_.1} parent=1 // pred_region
      _
    $region37: #{_lambda_.1} parent=1 // pred_fallthru
      _
    // Predicated region
    $region38: #{_lambda_.1} parent=1 // pred_check
      _
    $region39: #{_lambda_.1} parent=1 // pred_check_branch
      %69 = sbr.rel (0) target = $region41
    $region40: #{_lambda_.1} parent=1 // pred_region
      _
    $region41: #{_lambda_.1} parent=1 // pred_fallthru
      _
    // Predicated region
    $region42: #{_lambda_.1} parent=1 // pred_check
      _
    $region43: #{_lambda_.1} parent=1 // pred_check_branch
      %71 = sbr.rel (0) target = $region45
    $region44: #{_lambda_.1} parent=1 // pred_region
      _
    $region45: #{_lambda_.1} parent=1 // pred_fallthru
      _
    // Predicated region
    $region46: #{_lambda_.1} parent=1 // pred_check
      _
    $region47: #{_lambda_.1} parent=1 // pred_check_branch
      %73 = sbr.rel (0) target = $region49
    $region48: #{_lambda_.1} parent=1 // pred_region
      %74 = dma.done [#allocation6], 8192
    $region49: #{_lambda_.1} parent=1 // pred_fallthru
      _
    // Predicated region
    $region50: #{_lambda_.1} parent=1 // pred_check
      _
    $region51: #{_lambda_.1} parent=1 // pred_check_branch
      %76 = sbr.rel (0) target = $region53
    $region52: #{_lambda_.1} parent=1 // pred_region
      %77 = dma.done [#allocation8], 4096
    $region53: #{_lambda_.1} parent=1 // pred_fallthru
      _
    // Predicated region
    $region54: #{_lambda_.1} parent=1 // pred_check
      _
    $region55: #{_lambda_.1} parent=1 // pred_check_branch
      %79 = sbr.rel (0) target = $region57
    $region56: #{_lambda_.1} parent=1 // pred_region
      %80 = dma.done [#allocation8], 2048
    $region57: #{_lambda_.1} parent=1 // pred_fallthru
      _
    // Predicated region
    $region58: #{_lambda_.1} parent=1 // pred_check
      _
    $region59: #{_lambda_.1} parent=1 // pred_check_branch
      %82 = sbr.rel target = $region61
    $region60: #{_lambda_.1} parent=1 // pred_region
      %83 = sst [smem:[#allocation12]] [#allocation11]
      %84 = sst [smem:[#allocation13]] [#allocation10]
    $region61: #{_lambda_.1} parent=1 // pred_fallthru
      _
    %86 = shalt.err (0)
    %s88 = sshll.u32 [#allocation2], 4
    %s89 = int_to_ptr.vmem [resolvable:$true] %s88
    %91 = dma.hbm_to_vmem [thread:$0]  %s6, 8192, %s89, [#allocation4]
    %s92 = scalar_lea.sflag [#allocation4], 1
    // Predicated region
    $region62: #{_lambda_.1} parent=1 // pred_check
      _
    $region63: #{_lambda_.1} parent=1 // pred_check_branch
      %94 = sbr.rel target = $region65
    $region64: #{_lambda_.1} parent=1 // pred_region
      %95 = sst [smem:[#allocation12]] [#allocation15]
      %96 = sst [smem:[#allocation13]] [#allocation14]
    $region65: #{_lambda_.1} parent=1 // pred_fallthru
      _
    %98 = shalt.err (0)
    %s100 = sshll.u32 [#allocation3], 4
    %s101 = int_to_ptr.vmem [resolvable:$true] %s100
    %103 = dma.hbm_to_vmem [thread:$0]  %s11, 2048, %s101, %s92
    %v104 = vld [vmem:[%s0] sm:$0xf]
    %v105 = vld [vmem:[#allocation5] sm:$0xff]
    %v106 = vld [vmem:[#allocation5 + $0x8] sm:$0xff]
    %v107 = vld [vmem:[#allocation5 + $0x10] sm:$0xff]
    %v108 = vld [vmem:[#allocation5 + $0x18] sm:$0xff]
    %v109 = vld [vmem:[#allocation5 + $0x20] sm:$0xff]
    %v110 = vld [vmem:[#allocation5 + $0x28] sm:$0xff]
    %v111 = vld [vmem:[#allocation5 + $0x30] sm:$0xff]
    %v112 = vld [vmem:[#allocation5 + $0x38] sm:$0xff]
    %v113 = vld [vmem:[#allocation5 + $0x40] sm:$0xff]
    %v114 = vld [vmem:[#allocation5 + $0x48] sm:$0xff]
    %v115 = vld [vmem:[#allocation5 + $0x50] sm:$0xff]
    %v116 = vld [vmem:[#allocation5 + $0x58] sm:$0xff]
    %v117 = vld [vmem:[#allocation5 + $0x60] sm:$0xff]
    %v118 = vld [vmem:[#allocation5 + $0x68] sm:$0xff]
    %v119 = vld [vmem:[#allocation5 + $0x70] sm:$0xff]
    %v120 = vld [vmem:[#allocation5 + $0x78] sm:$0xff]
    %v121 = vld [vmem:[#allocation5 + $0x80] sm:$0xff]
    %v122 = vld [vmem:[#allocation5 + $0x88] sm:$0xff]
    %v123 = vld [vmem:[#allocation5 + $0x90] sm:$0xff]
    %v124 = vld [vmem:[#allocation5 + $0x98] sm:$0xff]
    %v125 = vld [vmem:[#allocation5 + $0xa0] sm:$0xff]
    %v126 = vld [vmem:[#allocation5 + $0xa8] sm:$0xff]
    %v127 = vld [vmem:[#allocation5 + $0xb0] sm:$0xff]
    %v128 = vld [vmem:[#allocation5 + $0xb8] sm:$0xff]
    %v129 = vld [vmem:[#allocation5 + $0xc0] sm:$0xff]
    %v130 = vld [vmem:[#allocation5 + $0xc8] sm:$0xff]
    %v131 = vld [vmem:[#allocation5 + $0xd0] sm:$0xff]
    %v132 = vld [vmem:[#allocation5 + $0xd8] sm:$0xff]
    %v133 = vld [vmem:[#allocation5 + $0xe0] sm:$0xff]
    %v134 = vld [vmem:[#allocation5 + $0xe8] sm:$0xff]
    %v135 = vld [vmem:[#allocation5 + $0xf0] sm:$0xff]
    %v136 = vld [vmem:[#allocation5 + $0xf8] sm:$0xff]
    %v137 = vld [vmem:[#allocation5 + $0x100] sm:$0xff]
    %v138 = vld [vmem:[#allocation5 + $0x108] sm:$0xff]
    %v139 = vld [vmem:[#allocation5 + $0x110] sm:$0xff]
    %v140 = vld [vmem:[#allocation5 + $0x118] sm:$0xff]
    %v141 = vld [vmem:[#allocation5 + $0x120] sm:$0xff]
    %v142 = vld [vmem:[#allocation5 + $0x128] sm:$0xff]
    %v143 = vld [vmem:[#allocation5 + $0x130] sm:$0xff]
    %v144 = vld [vmem:[#allocation5 + $0x138] sm:$0xff]
    %v145 = vld [vmem:[#allocation5 + $0x140] sm:$0xff]
    %v146 = vld [vmem:[#allocation5 + $0x148] sm:$0xff]
    %v147 = vld [vmem:[#allocation5 + $0x150] sm:$0xff]
    %v148 = vld [vmem:[#allocation5 + $0x158] sm:$0xff]
    %v149 = vld [vmem:[#allocation5 + $0x160] sm:$0xff]
    %v150 = vld [vmem:[#allocation5 + $0x168] sm:$0xff]
    %v151 = vld [vmem:[#allocation5 + $0x170] sm:$0xff]
    %v152 = vld [vmem:[#allocation5 + $0x178] sm:$0xff]
    %v153 = vld [vmem:[#allocation5 + $0x180] sm:$0xff]
    %v154 = vld [vmem:[#allocation5 + $0x188] sm:$0xff]
    %v155 = vld [vmem:[#allocation5 + $0x190] sm:$0xff]
    %v156 = vld [vmem:[#allocation5 + $0x198] sm:$0xff]
    %v157 = vld [vmem:[#allocation5 + $0x1a0] sm:$0xff]
    %v158 = vld [vmem:[#allocation5 + $0x1a8] sm:$0xff]
    %v159 = vld [vmem:[#allocation5 + $0x1b0] sm:$0xff]
    %v160 = vld [vmem:[#allocation5 + $0x1b8] sm:$0xff]
    %v161 = vld [vmem:[#allocation5 + $0x1c0] sm:$0xff]
    %v162 = vld [vmem:[#allocation5 + $0x1c8] sm:$0xff]
    %v163 = vld [vmem:[#allocation5 + $0x1d0] sm:$0xff]
    %v164 = vld [vmem:[#allocation5 + $0x1d8] sm:$0xff]
    %v165 = vld [vmem:[#allocation5 + $0x1e0] sm:$0xff]
    %v166 = vld [vmem:[#allocation5 + $0x1e8] sm:$0xff]
    %v167 = vld [vmem:[#allocation5 + $0x1f0] sm:$0xff]
    %v168 = vld [vmem:[#allocation5 + $0x1f8] sm:$0xff]
    %v169 = vld [vmem:[#allocation7] sm:$0xf]
    %v170 = vld [vmem:[#allocation7 + $0x4] sm:$0xf]
    %v171 = vld [vmem:[#allocation7 + $0x8] sm:$0xf]
    %v172 = vld [vmem:[#allocation7 + $0xc] sm:$0xf]
    %v173 = vld [vmem:[#allocation7 + $0x10] sm:$0xf]
    %v174 = vld [vmem:[#allocation7 + $0x14] sm:$0xf]
    %v175 = vld [vmem:[#allocation7 + $0x18] sm:$0xf]
    %v176 = vld [vmem:[#allocation7 + $0x1c] sm:$0xf]
    %v177 = vld [vmem:[#allocation7 + $0x20] sm:$0xf]
    %v178 = vld [vmem:[#allocation7 + $0x24] sm:$0xf]
    %v179 = vld [vmem:[#allocation7 + $0x28] sm:$0xf]
    %v180 = vld [vmem:[#allocation7 + $0x2c] sm:$0xf]
    %v181 = vld [vmem:[#allocation7 + $0x30] sm:$0xf]
    %v182 = vld [vmem:[#allocation7 + $0x34] sm:$0xf]
    %v183 = vld [vmem:[#allocation7 + $0x38] sm:$0xf]
    %v184 = vld [vmem:[#allocation7 + $0x3c] sm:$0xf]
    %v185 = vld [vmem:[#allocation7 + $0x40] sm:$0xf]
    %v186 = vld [vmem:[#allocation7 + $0x44] sm:$0xf]
    %v187 = vld [vmem:[#allocation7 + $0x48] sm:$0xf]
    %v188 = vld [vmem:[#allocation7 + $0x4c] sm:$0xf]
    %v189 = vld [vmem:[#allocation7 + $0x50] sm:$0xf]
    %v190 = vld [vmem:[#allocation7 + $0x54] sm:$0xf]
    %v191 = vld [vmem:[#allocation7 + $0x58] sm:$0xf]
    %v192 = vld [vmem:[#allocation7 + $0x5c] sm:$0xf]
    %v193 = vld [vmem:[#allocation7 + $0x60] sm:$0xf]
    %v194 = vld [vmem:[#allocation7 + $0x64] sm:$0xf]
    %v195 = vld [vmem:[#allocation7 + $0x68] sm:$0xf]
    %v196 = vld [vmem:[#allocation7 + $0x6c] sm:$0xf]
    %v197 = vld [vmem:[#allocation7 + $0x70] sm:$0xf]
    %v198 = vld [vmem:[#allocation7 + $0x74] sm:$0xf]
    %v199 = vld [vmem:[#allocation7 + $0x78] sm:$0xf]
    %v200 = vld [vmem:[#allocation7 + $0x7c] sm:$0xf]
    %v201 = vld [vmem:[#allocation7 + $0x80] sm:$0xf]
    %v202 = vld [vmem:[#allocation7 + $0x84] sm:$0xf]
    %v203 = vld [vmem:[#allocation7 + $0x88] sm:$0xf]
    %v204 = vld [vmem:[#allocation7 + $0x8c] sm:$0xf]
    %v205 = vld [vmem:[#allocation7 + $0x90] sm:$0xf]
    %v206 = vld [vmem:[#allocation7 + $0x94] sm:$0xf]
    %v207 = vld [vmem:[#allocation7 + $0x98] sm:$0xf]
    %v208 = vld [vmem:[#allocation7 + $0x9c] sm:$0xf]
    %v209 = vld [vmem:[#allocation7 + $0xa0] sm:$0xf]
    %v210 = vld [vmem:[#allocation7 + $0xa4] sm:$0xf]
    %v211 = vld [vmem:[#allocation7 + $0xa8] sm:$0xf]
    %v212 = vld [vmem:[#allocation7 + $0xac] sm:$0xf]
    %v213 = vld [vmem:[#allocation7 + $0xb0] sm:$0xf]
    %v214 = vld [vmem:[#allocation7 + $0xb4] sm:$0xf]
    %v215 = vld [vmem:[#allocation7 + $0xb8] sm:$0xf]
    %v216 = vld [vmem:[#allocation7 + $0xbc] sm:$0xf]
    %v217 = vld [vmem:[#allocation7 + $0xc0] sm:$0xf]
    %v218 = vld [vmem:[#allocation7 + $0xc4] sm:$0xf]
    %v219 = vld [vmem:[#allocation7 + $0xc8] sm:$0xf]
    %v220 = vld [vmem:[#allocation7 + $0xcc] sm:$0xf]
    %v221 = vld [vmem:[#allocation7 + $0xd0] sm:$0xf]
    %v222 = vld [vmem:[#allocation7 + $0xd4] sm:$0xf]
    %v223 = vld [vmem:[#allocation7 + $0xd8] sm:$0xf]
    %v224 = vld [vmem:[#allocation7 + $0xdc] sm:$0xf]
    %v225 = vld [vmem:[#allocation7 + $0xe0] sm:$0xf]
    %v226 = vld [vmem:[#allocation7 + $0xe4] sm:$0xf]
    %v227 = vld [vmem:[#allocation7 + $0xe8] sm:$0xf]
    %v228 = vld [vmem:[#allocation7 + $0xec] sm:$0xf]
    %v229 = vld [vmem:[#allocation7 + $0xf0] sm:$0xf]
    %v230 = vld [vmem:[#allocation7 + $0xf4] sm:$0xf]
    %v231 = vld [vmem:[#allocation7 + $0xf8] sm:$0xf]
    %v232 = vld [vmem:[#allocation7 + $0xfc] sm:$0xf]
    %v233 = vld [vmem:[%s3] sm:$0xff]
    %v234 = vld [vmem:[%s3 + $0x8] sm:$0xff]
    %v235 = vld [vmem:[%s4] sm:$0x1]
    %v236 = vld [vmem:[%s5] sm:$0x1]
    %v237 = vunpack.c.l.bf16 %v105
    %v238 = vunpack.c.h.bf16 %v105
    %v239 = vunpack.c.l.bf16 %v106
    %v240 = vunpack.c.h.bf16 %v106
    %v241 = vunpack.c.l.bf16 %v107
    %v242 = vunpack.c.h.bf16 %v107
    %v243 = vunpack.c.l.bf16 %v108
    %v244 = vunpack.c.h.bf16 %v108
    %v245 = vunpack.c.l.bf16 %v109
    %v246 = vunpack.c.h.bf16 %v109
    %v247 = vunpack.c.l.bf16 %v110
    %v248 = vunpack.c.h.bf16 %v110
    %v249 = vunpack.c.l.bf16 %v111
    %v250 = vunpack.c.h.bf16 %v111
    %v251 = vunpack.c.l.bf16 %v112
    %v252 = vunpack.c.h.bf16 %v112
    %v253 = vunpack.c.l.bf16 %v113
    %v254 = vunpack.c.h.bf16 %v113
    %v255 = vunpack.c.l.bf16 %v114
    %v256 = vunpack.c.h.bf16 %v114
    %v257 = vunpack.c.l.bf16 %v115
    %v258 = vunpack.c.h.bf16 %v115
    %v259 = vunpack.c.l.bf16 %v116
    %v260 = vunpack.c.h.bf16 %v116
    %v261 = vunpack.c.l.bf16 %v117
    %v262 = vunpack.c.h.bf16 %v117
    %v263 = vunpack.c.l.bf16 %v118
    %v264 = vunpack.c.h.bf16 %v118
    %v265 = vunpack.c.l.bf16 %v119
    %v266 = vunpack.c.h.bf16 %v119
    %v267 = vunpack.c.l.bf16 %v120
    %v268 = vunpack.c.h.bf16 %v120
    %v269 = vunpack.c.l.bf16 %v121
    %v270 = vunpack.c.h.bf16 %v121
    %v271 = vunpack.c.l.bf16 %v122
    %v272 = vunpack.c.h.bf16 %v122
    %v273 = vunpack.c.l.bf16 %v123
    %v274 = vunpack.c.h.bf16 %v123
    %v275 = vunpack.c.l.bf16 %v124
    %v276 = vunpack.c.h.bf16 %v124
    %v277 = vunpack.c.l.bf16 %v125
    %v278 = vunpack.c.h.bf16 %v125
    %v279 = vunpack.c.l.bf16 %v126
    %v280 = vunpack.c.h.bf16 %v126
    %v281 = vunpack.c.l.bf16 %v127
    %v282 = vunpack.c.h.bf16 %v127
    %v283 = vunpack.c.l.bf16 %v128
    %v284 = vunpack.c.h.bf16 %v128
    %v285 = vunpack.c.l.bf16 %v129
    %v286 = vunpack.c.h.bf16 %v129
    %v287 = vunpack.c.l.bf16 %v130
    %v288 = vunpack.c.h.bf16 %v130
    %v289 = vunpack.c.l.bf16 %v131
    %v290 = vunpack.c.h.bf16 %v131
    %v291 = vunpack.c.l.bf16 %v132
    %v292 = vunpack.c.h.bf16 %v132
    %v293 = vunpack.c.l.bf16 %v133
    %v294 = vunpack.c.h.bf16 %v133
    %v295 = vunpack.c.l.bf16 %v134
    %v296 = vunpack.c.h.bf16 %v134
    %v297 = vunpack.c.l.bf16 %v135
    %v298 = vunpack.c.h.bf16 %v135
    %v299 = vunpack.c.l.bf16 %v136
    %v300 = vunpack.c.h.bf16 %v136
    %v301 = vunpack.c.l.bf16 %v137
    %v302 = vunpack.c.h.bf16 %v137
    %v303 = vunpack.c.l.bf16 %v138
    %v304 = vunpack.c.h.bf16 %v138
    %v305 = vunpack.c.l.bf16 %v139
    %v306 = vunpack.c.h.bf16 %v139
    %v307 = vunpack.c.l.bf16 %v140
    %v308 = vunpack.c.h.bf16 %v140
    %v309 = vunpack.c.l.bf16 %v141
    %v310 = vunpack.c.h.bf16 %v141
    %v311 = vunpack.c.l.bf16 %v142
    %v312 = vunpack.c.h.bf16 %v142
    %v313 = vunpack.c.l.bf16 %v143
    %v314 = vunpack.c.h.bf16 %v143
    %v315 = vunpack.c.l.bf16 %v144
    %v316 = vunpack.c.h.bf16 %v144
    %v317 = vunpack.c.l.bf16 %v145
    %v318 = vunpack.c.h.bf16 %v145
    %v319 = vunpack.c.l.bf16 %v146
    %v320 = vunpack.c.h.bf16 %v146
    %v321 = vunpack.c.l.bf16 %v147
    %v322 = vunpack.c.h.bf16 %v147
    %v323 = vunpack.c.l.bf16 %v148
    %v324 = vunpack.c.h.bf16 %v148
    %v325 = vunpack.c.l.bf16 %v149
    %v326 = vunpack.c.h.bf16 %v149
    %v327 = vunpack.c.l.bf16 %v150
    %v328 = vunpack.c.h.bf16 %v150
    %v329 = vunpack.c.l.bf16 %v151
    %v330 = vunpack.c.h.bf16 %v151
    %v331 = vunpack.c.l.bf16 %v152
    %v332 = vunpack.c.h.bf16 %v152
    %v333 = vunpack.c.l.bf16 %v153
    %v334 = vunpack.c.h.bf16 %v153
    %v335 = vunpack.c.l.bf16 %v154
    %v336 = vunpack.c.h.bf16 %v154
    %v337 = vunpack.c.l.bf16 %v155
    %v338 = vunpack.c.h.bf16 %v155
    %v339 = vunpack.c.l.bf16 %v156
    %v340 = vunpack.c.h.bf16 %v156
    %v341 = vunpack.c.l.bf16 %v157
    %v342 = vunpack.c.h.bf16 %v157
    %v343 = vunpack.c.l.bf16 %v158
    %v344 = vunpack.c.h.bf16 %v158
    %v345 = vunpack.c.l.bf16 %v159
    %v346 = vunpack.c.h.bf16 %v159
    %v347 = vunpack.c.l.bf16 %v160
    %v348 = vunpack.c.h.bf16 %v160
    %v349 = vunpack.c.l.bf16 %v161
    %v350 = vunpack.c.h.bf16 %v161
    %v351 = vunpack.c.l.bf16 %v162
    %v352 = vunpack.c.h.bf16 %v162
    %v353 = vunpack.c.l.bf16 %v163
    %v354 = vunpack.c.h.bf16 %v163
    %v355 = vunpack.c.l.bf16 %v164
    %v356 = vunpack.c.h.bf16 %v164
    %v357 = vunpack.c.l.bf16 %v165
    %v358 = vunpack.c.h.bf16 %v165
    %v359 = vunpack.c.l.bf16 %v166
    %v360 = vunpack.c.h.bf16 %v166
    %v361 = vunpack.c.l.bf16 %v167
    %v362 = vunpack.c.h.bf16 %v167
    %v363 = vunpack.c.l.bf16 %v168
    %v364 = vunpack.c.h.bf16 %v168
    %v365 = vunpack.c.l.bf16 %v169
    %v366 = vunpack.c.l.bf16 %v170
    %v367 = vunpack.c.l.bf16 %v171
    %v368 = vunpack.c.l.bf16 %v172
    %v369 = vunpack.c.l.bf16 %v173
    %v370 = vunpack.c.l.bf16 %v174
    %v371 = vunpack.c.l.bf16 %v175
    %v372 = vunpack.c.l.bf16 %v176
    %v373 = vunpack.c.l.bf16 %v177
    %v374 = vunpack.c.l.bf16 %v178
    %v375 = vunpack.c.l.bf16 %v179
    %v376 = vunpack.c.l.bf16 %v180
    %v377 = vunpack.c.l.bf16 %v181
    %v378 = vunpack.c.l.bf16 %v182
    %v379 = vunpack.c.l.bf16 %v183
    %v380 = vunpack.c.l.bf16 %v184
    %v381 = vunpack.c.l.bf16 %v185
    %v382 = vunpack.c.l.bf16 %v186
    %v383 = vunpack.c.l.bf16 %v187
    %v384 = vunpack.c.l.bf16 %v188
    %v385 = vunpack.c.l.bf16 %v189
    %v386 = vunpack.c.l.bf16 %v190
    %v387 = vunpack.c.l.bf16 %v191
    %v388 = vunpack.c.l.bf16 %v192
    %v389 = vunpack.c.l.bf16 %v193
    %v390 = vunpack.c.l.bf16 %v194
    %v391 = vunpack.c.l.bf16 %v195
    %v392 = vunpack.c.l.bf16 %v196
    %v393 = vunpack.c.l.bf16 %v197
    %v394 = vunpack.c.l.bf16 %v198
    %v395 = vunpack.c.l.bf16 %v199
    %v396 = vunpack.c.l.bf16 %v200
    %v397 = vunpack.c.l.bf16 %v201
    %v398 = vunpack.c.l.bf16 %v202
    %v399 = vunpack.c.l.bf16 %v203
    %v400 = vunpack.c.l.bf16 %v204
    %v401 = vunpack.c.l.bf16 %v205
    %v402 = vunpack.c.l.bf16 %v206
    %v403 = vunpack.c.l.bf16 %v207
    %v404 = vunpack.c.l.bf16 %v208
    %v405 = vunpack.c.l.bf16 %v209
    %v406 = vunpack.c.l.bf16 %v210
    %v407 = vunpack.c.l.bf16 %v211
    %v408 = vunpack.c.l.bf16 %v212
    %v409 = vunpack.c.l.bf16 %v213
    %v410 = vunpack.c.l.bf16 %v214
    %v411 = vunpack.c.l.bf16 %v215
    %v412 = vunpack.c.l.bf16 %v216
    %v413 = vunpack.c.l.bf16 %v217
    %v414 = vunpack.c.l.bf16 %v218
    %v415 = vunpack.c.l.bf16 %v219
    %v416 = vunpack.c.l.bf16 %v220
    %v417 = vunpack.c.l.bf16 %v221
    %v418 = vunpack.c.l.bf16 %v222
    %v419 = vunpack.c.l.bf16 %v223
    %v420 = vunpack.c.l.bf16 %v224
    %v421 = vunpack.c.l.bf16 %v225
    %v422 = vunpack.c.l.bf16 %v226
    %v423 = vunpack.c.l.bf16 %v227
    %v424 = vunpack.c.l.bf16 %v228
    %v425 = vunpack.c.l.bf16 %v229
    %v426 = vunpack.c.l.bf16 %v230
    %v427 = vunpack.c.l.bf16 %v231
    %v428 = vunpack.c.l.bf16 %v232
    %v429 = vunpack.c.l.bf16 %v233
    %v430 = vunpack.c.h.bf16 %v233
    %v431 = vunpack.c.l.bf16 %v234
    %v432 = vunpack.c.h.bf16 %v234
    %v435 = vunpack.c.l.s4 1983009808
    %v436 = vunpack.c.0.s8 %v435
    %v437 = vlaneseq
    %v438 = vshrl.u32 %v437, 7
    %v439 = vsub.s32 %v436, %v438
    %v440 = vrot.slane %v104, %v439
    %v441 = vcombine.high %v440, %v440
    %444 = vmatprep.subr.mxu0 %v298
    %445 = vmatpush1.msra.mxu0 %v297
    %446 = vmatprep.subr.mxu0 %v294
    %447 = vmatpush1.msra.mxu0 %v293
    %448 = vmatprep.subr.mxu0 %v290
    %449 = vmatpush1.msra.mxu0 %v289
    %450 = vmatprep.subr.mxu0 %v286
    %451 = vmatpush1.msra.mxu0 %v285
    %452 = vmatprep.subr.mxu0 %v282
    %453 = vmatpush1.msra.mxu0 %v281
    %454 = vmatprep.subr.mxu0 %v278
    %455 = vmatpush1.msra.mxu0 %v277
    %456 = vmatprep.subr.mxu0 %v274
    %457 = vmatpush1.msra.mxu0 %v273
    %458 = vmatprep.subr.mxu0 %v270
    %459 = vmatpush1.msra.mxu0 %v269
    %460 = vmatprep.subr.mxu0 %v266
    %461 = vmatpush1.msra.mxu0 %v265
    %462 = vmatprep.subr.mxu0 %v262
    %463 = vmatpush1.msra.mxu0 %v261
    %464 = vmatprep.subr.mxu0 %v258
    %465 = vmatpush1.msra.mxu0 %v257
    %466 = vmatprep.subr.mxu0 %v254
    %467 = vmatpush1.msra.mxu0 %v253
    %468 = vmatprep.subr.mxu0 %v250
    %469 = vmatpush1.msra.mxu0 %v249
    %470 = vmatprep.subr.mxu0 %v246
    %471 = vmatpush1.msra.mxu0 %v245
    %472 = vmatprep.subr.mxu0 %v242
    %473 = vmatpush1.msra.mxu0 %v241
    %474 = vmatprep.subr.mxu0 %v238
    %475 = vmatpush1.msra.mxu0 %v237
    %476 = vmatprep.subr.mxu0 %v362
    %477 = vmatpush2.msra.mxu0 %v361
    %478 = vmatprep.subr.mxu0 %v358
    %479 = vmatpush2.msra.mxu0 %v357
    %480 = vmatprep.subr.mxu0 %v354
    %481 = vmatpush2.msra.mxu0 %v353
    %482 = vmatprep.subr.mxu0 %v350
    %483 = vmatpush2.msra.mxu0 %v349
    %484 = vmatprep.subr.mxu0 %v346
    %485 = vmatpush2.msra.mxu0 %v345
    %486 = vmatprep.subr.mxu0 %v342
    %487 = vmatpush2.msra.mxu0 %v341
    %488 = vmatprep.subr.mxu0 %v338
    %489 = vmatpush2.msra.mxu0 %v337
    %490 = vmatprep.subr.mxu0 %v334
    %491 = vmatpush2.msra.mxu0 %v333
    %492 = vmatprep.subr.mxu0 %v330
    %493 = vmatpush2.msra.mxu0 %v329
    %494 = vmatprep.subr.mxu0 %v326
    %495 = vmatpush2.msra.mxu0 %v325
    %496 = vmatprep.subr.mxu0 %v322
    %497 = vmatpush2.msra.mxu0 %v321
    %498 = vmatprep.subr.mxu0 %v318
    %499 = vmatpush2.msra.mxu0 %v317
    %500 = vmatprep.subr.mxu0 %v314
    %501 = vmatpush2.msra.mxu0 %v313
    %502 = vmatprep.subr.mxu0 %v310
    %503 = vmatpush2.msra.mxu0 %v309
    %504 = vmatprep.subr.mxu0 %v306
    %505 = vmatpush2.msra.mxu0 %v305
    %506 = vmatprep.subr.mxu0 %v302
    %507 = vmatpush2.msra.mxu0 %v301
    %508 = vmatprep.mubr.f32.mxu0 %v441
    %509 = vmatmul.mubr.f32.gmra.mxu0 %v440
    %v510 = vpop.f32.mrf.mxu0
    %v511 = vadd.f32 0.0, %v510
    %v512 = vpop.f32.mrf.mxu0
    %v513 = vadd.f32 0.0, %v512
    %514 = vdwg.mxu0
    %515 = vmatprep.subr.mxu0 %v300
    %516 = vmatpush1.msra.mxu0 %v299
    %517 = vmatprep.subr.mxu0 %v296
    %518 = vmatpush1.msra.mxu0 %v295
    %519 = vmatprep.subr.mxu0 %v292
    %520 = vmatpush1.msra.mxu0 %v291
    %521 = vmatprep.subr.mxu0 %v288
    %522 = vmatpush1.msra.mxu0 %v287
    %523 = vmatprep.subr.mxu0 %v284
    %524 = vmatpush1.msra.mxu0 %v283
    %525 = vmatprep.subr.mxu0 %v280
    %526 = vmatpush1.msra.mxu0 %v279
    %527 = vmatprep.subr.mxu0 %v276
    %528 = vmatpush1.msra.mxu0 %v275
    %529 = vmatprep.subr.mxu0 %v272
    %530 = vmatpush1.msra.mxu0 %v271
    %531 = vmatprep.subr.mxu0 %v268
    %532 = vmatpush1.msra.mxu0 %v267
    %533 = vmatprep.subr.mxu0 %v264
    %534 = vmatpush1.msra.mxu0 %v263
    %535 = vmatprep.subr.mxu0 %v260
    %536 = vmatpush1.msra.mxu0 %v259
    %537 = vmatprep.subr.mxu0 %v256
    %538 = vmatpush1.msra.mxu0 %v255
    %539 = vmatprep.subr.mxu0 %v252
    %540 = vmatpush1.msra.mxu0 %v251
    %541 = vmatprep.subr.mxu0 %v248
    %542 = vmatpush1.msra.mxu0 %v247
    %543 = vmatprep.subr.mxu0 %v244
    %544 = vmatpush1.msra.mxu0 %v243
    %545 = vmatprep.subr.mxu0 %v240
    %546 = vmatpush1.msra.mxu0 %v239
    %547 = vmatprep.subr.mxu0 %v364
    %548 = vmatpush2.msra.mxu0 %v363
    %549 = vmatprep.subr.mxu0 %v360
    %550 = vmatpush2.msra.mxu0 %v359
    %551 = vmatprep.subr.mxu0 %v356
    %552 = vmatpush2.msra.mxu0 %v355
    %553 = vmatprep.subr.mxu0 %v352
    %554 = vmatpush2.msra.mxu0 %v351
    %555 = vmatprep.subr.mxu0 %v348
    %556 = vmatpush2.msra.mxu0 %v347
    %557 = vmatprep.subr.mxu0 %v344
    %558 = vmatpush2.msra.mxu0 %v343
    %559 = vmatprep.subr.mxu0 %v340
    %560 = vmatpush2.msra.mxu0 %v339
    %561 = vmatprep.subr.mxu0 %v336
    %562 = vmatpush2.msra.mxu0 %v335
    %563 = vmatprep.subr.mxu0 %v332
    %564 = vmatpush2.msra.mxu0 %v331
    %565 = vmatprep.subr.mxu0 %v328
    %566 = vmatpush2.msra.mxu0 %v327
    %567 = vmatprep.subr.mxu0 %v324
    %568 = vmatpush2.msra.mxu0 %v323
    %569 = vmatprep.subr.mxu0 %v320
    %570 = vmatpush2.msra.mxu0 %v319
    %571 = vmatprep.subr.mxu0 %v316
    %572 = vmatpush2.msra.mxu0 %v315
    %573 = vmatprep.subr.mxu0 %v312
    %574 = vmatpush2.msra.mxu0 %v311
    %575 = vmatprep.subr.mxu0 %v308
    %576 = vmatpush2.msra.mxu0 %v307
    %577 = vmatprep.subr.mxu0 %v304
    %578 = vmatpush2.msra.mxu0 %v303
    %579 = vmatprep.mubr.f32.mxu0 %v441
    %580 = vmatmul.mubr.f32.gmra.mxu0 %v440
    %v581 = vpop.f32.mrf.mxu0
    %v582 = vadd.f32 0.0, %v581
    %v583 = vpop.f32.mrf.mxu0
    %v584 = vadd.f32 0.0, %v583
    %585 = vdwg.mxu0
    %vm586 = vcmask 1041408
    %v587 = vsel %vm586, %v511, 0.0
    %v588 = vrot.slane %v587, 4
    %v589 = vadd.f32 %v587, %v588
    %v590 = vrot.slane %v589, 2
    %v591 = vadd.f32 %v589, %v590
    %v592 = vrot.slane %v591, 1
    %v593 = vadd.f32 %v591, %v592
    %v594 = vsel %vm586, %v513, 0.0
    %v595 = vrot.slane %v594, 4
    %v596 = vadd.f32 %v594, %v595
    %v597 = vrot.slane %v596, 2
    %v598 = vadd.f32 %v596, %v597
    %v599 = vrot.slane %v598, 1
    %v600 = vadd.f32 %v598, %v599
    %v601 = vsel %vm586, %v582, 0.0
    %v602 = vrot.slane %v601, 4
    %v603 = vadd.f32 %v601, %v602
    %v604 = vrot.slane %v603, 2
    %v605 = vadd.f32 %v603, %v604
    %v606 = vrot.slane %v605, 1
    %v607 = vadd.f32 %v605, %v606
    %v608 = vsel %vm586, %v584, 0.0
    %v609 = vrot.slane %v608, 4
    %v610 = vadd.f32 %v608, %v609
    %v611 = vrot.slane %v610, 2
    %v612 = vadd.f32 %v610, %v611
    %v613 = vrot.slane %v612, 1
    %v614 = vadd.f32 %v612, %v613
    %v615 = vmul.f32 %v511, %v511
    %v616 = vmul.f32 %v513, %v513
    %v617 = vmul.f32 %v582, %v582
    %v618 = vmul.f32 %v584, %v584
    %v619 = vsel %vm586, %v615, 0.0
    %v620 = vrot.slane %v619, 4
    %v621 = vadd.f32 %v619, %v620
    %v622 = vrot.slane %v621, 2
    %v623 = vadd.f32 %v621, %v622
    %v624 = vrot.slane %v623, 1
    %v625 = vadd.f32 %v623, %v624
    %v626 = vsel %vm586, %v616, 0.0
    %v627 = vrot.slane %v626, 4
    %v628 = vadd.f32 %v626, %v627
    %v629 = vrot.slane %v628, 2
    %v630 = vadd.f32 %v628, %v629
    %v631 = vrot.slane %v630, 1
    %v632 = vadd.f32 %v630, %v631
    %v633 = vsel %vm586, %v617, 0.0
    %v634 = vrot.slane %v633, 4
    %v635 = vadd.f32 %v633, %v634
    %v636 = vrot.slane %v635, 2
    %v637 = vadd.f32 %v635, %v636
    %v638 = vrot.slane %v637, 1
    %v639 = vadd.f32 %v637, %v638
    %v640 = vsel %vm586, %v618, 0.0
    %v641 = vrot.slane %v640, 4
    %v642 = vadd.f32 %v640, %v641
    %v643 = vrot.slane %v642, 2
    %v644 = vadd.f32 %v642, %v643
    %v645 = vrot.slane %v644, 1
    %v646 = vadd.f32 %v644, %v645
    %vm647 = vcmask 1040384
    %v648 = vsel %vm647, %v593, %v625
    %v649 = vsel %vm647, %v600, %v632
    %v650 = vsel %vm647, %v607, %v639
    %v651 = vsel %vm647, %v614, %v646
    %652 = vmatprep.subr.mxu0 0.0
    %653 = vmatpush1.msra.mxu0 %v380
    %654 = vmatprep.subr.mxu0 0.0
    %655 = vmatpush1.msra.mxu0 %v379
    %656 = vmatprep.subr.mxu0 0.0
    %657 = vmatpush1.msra.mxu0 %v378
    %658 = vmatprep.subr.mxu0 0.0
    %659 = vmatpush1.msra.mxu0 %v377
    %660 = vmatprep.subr.mxu0 0.0
    %661 = vmatpush1.msra.mxu0 %v376
    %662 = vmatprep.subr.mxu0 0.0
    %663 = vmatpush1.msra.mxu0 %v375
    %664 = vmatprep.subr.mxu0 0.0
    %665 = vmatpush1.msra.mxu0 %v374
    %666 = vmatprep.subr.mxu0 0.0
    %667 = vmatpush1.msra.mxu0 %v373
    %668 = vmatprep.subr.mxu0 0.0
    %669 = vmatpush1.msra.mxu0 %v372
    %670 = vmatprep.subr.mxu0 0.0
    %671 = vmatpush1.msra.mxu0 %v371
    %672 = vmatprep.subr.mxu0 0.0
    %673 = vmatpush1.msra.mxu0 %v370
    %674 = vmatprep.subr.mxu0 0.0
    %675 = vmatpush1.msra.mxu0 %v369
    %676 = vmatprep.subr.mxu0 0.0
    %677 = vmatpush1.msra.mxu0 %v368
    %678 = vmatprep.subr.mxu0 0.0
    %679 = vmatpush1.msra.mxu0 %v367
    %680 = vmatprep.subr.mxu0 0.0
    %681 = vmatpush1.msra.mxu0 %v366
    %682 = vmatprep.subr.mxu0 0.0
    %683 = vmatpush1.msra.mxu0 %v365
    %684 = vmatprep.subr.mxu0 0.0
    %685 = vmatpush2.msra.mxu0 %v396
    %686 = vmatprep.subr.mxu0 0.0
    %687 = vmatpush2.msra.mxu0 %v395
    %688 = vmatprep.subr.mxu0 0.0
    %689 = vmatpush2.msra.mxu0 %v394
    %690 = vmatprep.subr.mxu0 0.0
    %691 = vmatpush2.msra.mxu0 %v393
    %692 = vmatprep.subr.mxu0 0.0
    %693 = vmatpush2.msra.mxu0 %v392
    %694 = vmatprep.subr.mxu0 0.0
    %695 = vmatpush2.msra.mxu0 %v391
    %696 = vmatprep.subr.mxu0 0.0
    %697 = vmatpush2.msra.mxu0 %v390
    %698 = vmatprep.subr.mxu0 0.0
    %699 = vmatpush2.msra.mxu0 %v389
    %700 = vmatprep.subr.mxu0 0.0
    %701 = vmatpush2.msra.mxu0 %v388
    %702 = vmatprep.subr.mxu0 0.0
    %703 = vmatpush2.msra.mxu0 %v387
    %704 = vmatprep.subr.mxu0 0.0
    %705 = vmatpush2.msra.mxu0 %v386
    %706 = vmatprep.subr.mxu0 0.0
    %707 = vmatpush2.msra.mxu0 %v385
    %708 = vmatprep.subr.mxu0 0.0
    %709 = vmatpush2.msra.mxu0 %v384
    %710 = vmatprep.subr.mxu0 0.0
    %711 = vmatpush2.msra.mxu0 %v383
    %712 = vmatprep.subr.mxu0 0.0
    %713 = vmatpush2.msra.mxu0 %v382
    %714 = vmatprep.subr.mxu0 0.0
    %715 = vmatpush2.msra.mxu0 %v381
    %716 = vmatprep.mubr.f32.mxu0 %v649
    %717 = vmatmul.mubr.f32.gmra.mxu0 %v648
    %v718 = vpop.f32.mrf.mxu0
    %v719 = vadd.f32 0.0, %v718
    %v720 = vpop.f32.mrf.mxu0
    %721 = vdwg.mxu0
    %722 = vmatprep.subr.mxu0 0.0
    %723 = vmatpush1.msra.mxu0 %v412
    %724 = vmatprep.subr.mxu0 0.0
    %725 = vmatpush1.msra.mxu0 %v411
    %726 = vmatprep.subr.mxu0 0.0
    %727 = vmatpush1.msra.mxu0 %v410
    %728 = vmatprep.subr.mxu0 0.0
    %729 = vmatpush1.msra.mxu0 %v409
    %730 = vmatprep.subr.mxu0 0.0
    %731 = vmatpush1.msra.mxu0 %v408
    %732 = vmatprep.subr.mxu0 0.0
    %733 = vmatpush1.msra.mxu0 %v407
    %734 = vmatprep.subr.mxu0 0.0
    %735 = vmatpush1.msra.mxu0 %v406
    %736 = vmatprep.subr.mxu0 0.0
    %737 = vmatpush1.msra.mxu0 %v405
    %738 = vmatprep.subr.mxu0 0.0
    %739 = vmatpush1.msra.mxu0 %v404
    %740 = vmatprep.subr.mxu0 0.0
    %741 = vmatpush1.msra.mxu0 %v403
    %742 = vmatprep.subr.mxu0 0.0
    %743 = vmatpush1.msra.mxu0 %v402
    %744 = vmatprep.subr.mxu0 0.0
    %745 = vmatpush1.msra.mxu0 %v401
    %746 = vmatprep.subr.mxu0 0.0
    %747 = vmatpush1.msra.mxu0 %v400
    %748 = vmatprep.subr.mxu0 0.0
    %749 = vmatpush1.msra.mxu0 %v399
    %750 = vmatprep.subr.mxu0 0.0
    %751 = vmatpush1.msra.mxu0 %v398
    %752 = vmatprep.subr.mxu0 0.0
    %753 = vmatpush1.msra.mxu0 %v397
    %754 = vmatprep.subr.mxu0 0.0
    %755 = vmatpush2.msra.mxu0 %v428
    %756 = vmatprep.subr.mxu0 0.0
    %757 = vmatpush2.msra.mxu0 %v427
    %758 = vmatprep.subr.mxu0 0.0
    %759 = vmatpush2.msra.mxu0 %v426
    %760 = vmatprep.subr.mxu0 0.0
    %761 = vmatpush2.msra.mxu0 %v425
    %762 = vmatprep.subr.mxu0 0.0
    %763 = vmatpush2.msra.mxu0 %v424
    %764 = vmatprep.subr.mxu0 0.0
    %765 = vmatpush2.msra.mxu0 %v423
    %766 = vmatprep.subr.mxu0 0.0
    %767 = vmatpush2.msra.mxu0 %v422
    %768 = vmatprep.subr.mxu0 0.0
    %769 = vmatpush2.msra.mxu0 %v421
    %770 = vmatprep.subr.mxu0 0.0
    %771 = vmatpush2.msra.mxu0 %v420
    %772 = vmatprep.subr.mxu0 0.0
    %773 = vmatpush2.msra.mxu0 %v419
    %774 = vmatprep.subr.mxu0 0.0
    %775 = vmatpush2.msra.mxu0 %v418
    %776 = vmatprep.subr.mxu0 0.0
    %777 = vmatpush2.msra.mxu0 %v417
    %778 = vmatprep.subr.mxu0 0.0
    %779 = vmatpush2.msra.mxu0 %v416
    %780 = vmatprep.subr.mxu0 0.0
    %781 = vmatpush2.msra.mxu0 %v415
    %782 = vmatprep.subr.mxu0 0.0
    %783 = vmatpush2.msra.mxu0 %v414
    %784 = vmatprep.subr.mxu0 0.0
    %785 = vmatpush2.msra.mxu0 %v413
    %786 = vmatprep.mubr.f32.mxu0 %v651
    %787 = vmatmul.mubr.f32.gmra.mxu0 %v650
    %v788 = vpop.f32.mrf.mxu0
    %v789 = vadd.f32 %v719, %v788
    %v790 = vpop.f32.mrf.mxu0
    %791 = vdwg.mxu0
    %v792 = vmul.f32 %v789, 0.0078125
    %v793 = vmul.f32 %v792, %v792
    %v795 = vrot.slane %v793, 7
    %v797 = vsub.f32 %v792, %v795
    %v798 = vmax.f32 %v797, 0.0
    %v799 = vadd.f32 %v798, 1e-05
    %v800 = vrsqrt.pop %v799
    %v803 = vunpack.c.l.s4 1966171168
    %v804 = vunpack.c.0.s8 %v803
    %v805 = vlaneseq
    %v806 = vshrl.u32 %v805, 7
    %v807 = vsub.s32 %v804, %v806
    %v808 = vrot.slane %v800, %v807
    %v809 = vcombine.high %v808, %v808
    %v811 = vunpack.c.l.s4 1966171168
    %v812 = vunpack.c.0.s8 %v811
    %v813 = vlaneseq
    %v814 = vshrl.u32 %v813, 7
    %v815 = vsub.s32 %v812, %v814
    %v816 = vrot.slane %v809, %v815
    %v818 = vmul.f32 %v235, %v816
    %v819 = vmul.f32 %v792, %v818
    %v820 = vsub.f32 %v236, %v819
    %v822 = vlaneseq
    %v823 = vshrl.u32 %v822, 7
    %v824 = vsub.s32 0, %v823
    %v825 = vrot.slane %v820, %v824
    %v827 = vsel %vm647, %v818, %v825
    %vm828 = vcmask 64512
    %v830 = vsel %vm828, %v827, 0
    %832 = vmatprep.subr.mxu0 0.0
    %833 = vmatpush1.msra.mxu0 0.0
    %834 = vmatprep.subr.mxu0 0.0
    %835 = vmatpush1.msra.mxu0 0.0
    %836 = vmatprep.subr.mxu0 0.0
    %837 = vmatpush1.msra.mxu0 0.0
    %838 = vmatprep.subr.mxu0 0.0
    %839 = vmatpush1.msra.mxu0 0.0
    %840 = vmatprep.subr.mxu0 0.0
    %841 = vmatpush1.msra.mxu0 0.0
    %842 = vmatprep.subr.mxu0 0.0
    %843 = vmatpush1.msra.mxu0 0.0
    %844 = vmatprep.subr.mxu0 0.0
    %845 = vmatpush1.msra.mxu0 0.0
    %846 = vmatprep.subr.mxu0 0.0
    %847 = vmatpush1.msra.mxu0 0.0
    %848 = vmatprep.subr.mxu0 0.0
    %849 = vmatpush1.msra.mxu0 0.0
    %850 = vmatprep.subr.mxu0 0.0
    %851 = vmatpush1.msra.mxu0 0.0
    %852 = vmatprep.subr.mxu0 0.0
    %853 = vmatpush1.msra.mxu0 0.0
    %854 = vmatprep.subr.mxu0 0.0
    %855 = vmatpush1.msra.mxu0 0.0
    %856 = vmatprep.subr.mxu0 0.0
    %857 = vmatpush1.msra.mxu0 0.0
    %858 = vmatprep.subr.mxu0 0.0
    %859 = vmatpush1.msra.mxu0 0.0
    %860 = vmatprep.subr.mxu0 0.0
    %861 = vmatpush1.msra.mxu0 0.0
    %862 = vmatprep.subr.mxu0 %v430
    %863 = vmatpush1.msra.mxu0 %v429
    %864 = vmatprep.subr.mxu0 0.0
    %865 = vmatpush2.msra.mxu0 0.0
    %866 = vmatprep.subr.mxu0 0.0
    %867 = vmatpush2.msra.mxu0 0.0
    %868 = vmatprep.subr.mxu0 0.0
    %869 = vmatpush2.msra.mxu0 0.0
    %870 = vmatprep.subr.mxu0 0.0
    %871 = vmatpush2.msra.mxu0 0.0
    %872 = vmatprep.subr.mxu0 0.0
    %873 = vmatpush2.msra.mxu0 0.0
    %874 = vmatprep.subr.mxu0 0.0
    %875 = vmatpush2.msra.mxu0 0.0
    %876 = vmatprep.subr.mxu0 0.0
    %877 = vmatpush2.msra.mxu0 0.0
    %878 = vmatprep.subr.mxu0 0.0
    %879 = vmatpush2.msra.mxu0 0.0
    %880 = vmatprep.subr.mxu0 0.0
    %881 = vmatpush2.msra.mxu0 0.0
    %882 = vmatprep.subr.mxu0 0.0
    %883 = vmatpush2.msra.mxu0 0.0
    %884 = vmatprep.subr.mxu0 0.0
    %885 = vmatpush2.msra.mxu0 0.0
    %886 = vmatprep.subr.mxu0 0.0
    %887 = vmatpush2.msra.mxu0 0.0
    %888 = vmatprep.subr.mxu0 0.0
    %889 = vmatpush2.msra.mxu0 0.0
    %890 = vmatprep.subr.mxu0 0.0
    %891 = vmatpush2.msra.mxu0 0.0
    %892 = vmatprep.subr.mxu0 0.0
    %893 = vmatpush2.msra.mxu0 0.0
    %894 = vmatprep.subr.mxu0 0.0
    %895 = vmatpush2.msra.mxu0 0.0
    %896 = vmatprep.mubr.f32.mxu0 0.0
    %897 = vmatmul.mubr.f32.gmra.mxu0 %v830
    %v898 = vpop.f32.mrf.mxu0
    %v899 = vadd.f32 0.0, %v898
    %v900 = vpop.f32.mrf.mxu0
    %v901 = vadd.f32 0.0, %v900
    %902 = vdwg.mxu0
    %903 = vmatprep.subr.mxu0 0.0
    %904 = vmatpush1.msra.mxu0 0.0
    %905 = vmatprep.subr.mxu0 0.0
    %906 = vmatpush1.msra.mxu0 0.0
    %907 = vmatprep.subr.mxu0 0.0
    %908 = vmatpush1.msra.mxu0 0.0
    %909 = vmatprep.subr.mxu0 0.0
    %910 = vmatpush1.msra.mxu0 0.0
    %911 = vmatprep.subr.mxu0 0.0
    %912 = vmatpush1.msra.mxu0 0.0
    %913 = vmatprep.subr.mxu0 0.0
    %914 = vmatpush1.msra.mxu0 0.0
    %915 = vmatprep.subr.mxu0 0.0
    %916 = vmatpush1.msra.mxu0 0.0
    %917 = vmatprep.subr.mxu0 0.0
    %918 = vmatpush1.msra.mxu0 0.0
    %919 = vmatprep.subr.mxu0 0.0
    %920 = vmatpush1.msra.mxu0 0.0
    %921 = vmatprep.subr.mxu0 0.0
    %922 = vmatpush1.msra.mxu0 0.0
    %923 = vmatprep.subr.mxu0 0.0
    %924 = vmatpush1.msra.mxu0 0.0
    %925 = vmatprep.subr.mxu0 0.0
    %926 = vmatpush1.msra.mxu0 0.0
    %927 = vmatprep.subr.mxu0 0.0
    %928 = vmatpush1.msra.mxu0 0.0
    %929 = vmatprep.subr.mxu0 0.0
    %930 = vmatpush1.msra.mxu0 0.0
    %931 = vmatprep.subr.mxu0 0.0
    %932 = vmatpush1.msra.mxu0 0.0
    %933 = vmatprep.subr.mxu0 %v432
    %934 = vmatpush1.msra.mxu0 %v431
    %935 = vmatprep.subr.mxu0 0.0
    %936 = vmatpush2.msra.mxu0 0.0
    %937 = vmatprep.subr.mxu0 0.0
    %938 = vmatpush2.msra.mxu0 0.0
    %939 = vmatprep.subr.mxu0 0.0
    %940 = vmatpush2.msra.mxu0 0.0
    %941 = vmatprep.subr.mxu0 0.0
    %942 = vmatpush2.msra.mxu0 0.0
    %943 = vmatprep.subr.mxu0 0.0
    %944 = vmatpush2.msra.mxu0 0.0
    %945 = vmatprep.subr.mxu0 0.0
    %946 = vmatpush2.msra.mxu0 0.0
    %947 = vmatprep.subr.mxu0 0.0
    %948 = vmatpush2.msra.mxu0 0.0
    %949 = vmatprep.subr.mxu0 0.0
    %950 = vmatpush2.msra.mxu0 0.0
    %951 = vmatprep.subr.mxu0 0.0
    %952 = vmatpush2.msra.mxu0 0.0
    %953 = vmatprep.subr.mxu0 0.0
    %954 = vmatpush2.msra.mxu0 0.0
    %955 = vmatprep.subr.mxu0 0.0
    %956 = vmatpush2.msra.mxu0 0.0
    %957 = vmatprep.subr.mxu0 0.0
    %958 = vmatpush2.msra.mxu0 0.0
    %959 = vmatprep.subr.mxu0 0.0
    %960 = vmatpush2.msra.mxu0 0.0
    %961 = vmatprep.subr.mxu0 0.0
    %962 = vmatpush2.msra.mxu0 0.0
    %963 = vmatprep.subr.mxu0 0.0
    %964 = vmatpush2.msra.mxu0 0.0
    %965 = vmatprep.subr.mxu0 0.0
    %966 = vmatpush2.msra.mxu0 0.0
    %967 = vmatprep.mubr.f32.mxu0 0.0
    %968 = vmatmul.mubr.f32.gmra.mxu0 %v830
    %v969 = vpop.f32.mrf.mxu0
    %v970 = vadd.f32 0.0, %v969
    %v971 = vpop.f32.mrf.mxu0
    %v972 = vadd.f32 0.0, %v971
    %973 = vdwg.mxu0
    %v974 = vlaneseq
    %v975 = vshrl.u32 %v974, 7
    %v976 = vsub.s32 0, %v975
    %v977 = vrot.slane %v899, %v976
    %v978 = vlaneseq
    %v979 = vshrl.u32 %v978, 7
    %v980 = vsub.s32 0, %v979
    %v981 = vrot.slane %v901, %v980
    %v982 = vlaneseq
    %v983 = vshrl.u32 %v982, 7
    %v984 = vsub.s32 0, %v983
    %v985 = vrot.slane %v970, %v984
    %v986 = vlaneseq
    %v987 = vshrl.u32 %v986, 7
    %v988 = vsub.s32 0, %v987
    %v989 = vrot.slane %v972, %v988
    %v990 = vmul.f32 %v511, %v977
    %v991 = vmul.f32 %v513, %v981
    %v992 = vmul.f32 %v582, %v985
    %v993 = vmul.f32 %v584, %v989
    %v994 = vlaneseq
    %v995 = vshrl.u32 %v994, 7
    %v996 = vsub.s32 1, %v995
    %v997 = vrot.slane %v899, %v996
    %v998 = vlaneseq
    %v999 = vshrl.u32 %v998, 7
    %v1000 = vsub.s32 1, %v999
    %v1001 = vrot.slane %v901, %v1000
    %v1002 = vlaneseq
    %v1003 = vshrl.u32 %v1002, 7
    %v1004 = vsub.s32 1, %v1003
    %v1005 = vrot.slane %v970, %v1004
    %v1006 = vlaneseq
    %v1007 = vshrl.u32 %v1006, 7
    %v1008 = vsub.s32 1, %v1007
    %v1009 = vrot.slane %v972, %v1008
    %v1010 = vadd.f32 %v990, %v997
    %v1011 = vadd.f32 %v991, %v1001
    %v1012 = vadd.f32 %v992, %v1005
    %v1013 = vadd.f32 %v993, %v1009
    %v1014 = vmax.f32 %v1010, 0.0
    %v1015 = vmax.f32 %v1011, 0.0
    %v1016 = vmax.f32 %v1012, 0.0
    %v1017 = vmax.f32 %v1013, 0.0
    %s1018 = smul.u32 4, 64
    %s1019 = smul.u32 %s1018, 2
    %s1020 = sshll.u32 %s1019, 4
    %1021 = dma.done [#allocation4], %s1020
    %v1022 = vld [vmem:[#allocation2] sm:$0xff]
    %v1023 = vld [vmem:[#allocation2 + $0x8] sm:$0xff]
    %v1024 = vld [vmem:[#allocation2 + $0x10] sm:$0xff]
    %v1025 = vld [vmem:[#allocation2 + $0x18] sm:$0xff]
    %v1026 = vld [vmem:[#allocation2 + $0x20] sm:$0xff]
    %v1027 = vld [vmem:[#allocation2 + $0x28] sm:$0xff]
    %v1028 = vld [vmem:[#allocation2 + $0x30] sm:$0xff]
    %v1029 = vld [vmem:[#allocation2 + $0x38] sm:$0xff]
    %v1030 = vld [vmem:[#allocation2 + $0x40] sm:$0xff]
    %v1031 = vld [vmem:[#allocation2 + $0x48] sm:$0xff]
    %v1032 = vld [vmem:[#allocation2 + $0x50] sm:$0xff]
    %v1033 = vld [vmem:[#allocation2 + $0x58] sm:$0xff]
    %v1034 = vld [vmem:[#allocation2 + $0x60] sm:$0xff]
    %v1035 = vld [vmem:[#allocation2 + $0x68] sm:$0xff]
    %v1036 = vld [vmem:[#allocation2 + $0x70] sm:$0xff]
    %v1037 = vld [vmem:[#allocation2 + $0x78] sm:$0xff]
    %v1038 = vld [vmem:[#allocation2 + $0x80] sm:$0xff]
    %v1039 = vld [vmem:[#allocation2 + $0x88] sm:$0xff]
    %v1040 = vld [vmem:[#allocation2 + $0x90] sm:$0xff]
    %v1041 = vld [vmem:[#allocation2 + $0x98] sm:$0xff]
    %v1042 = vld [vmem:[#allocation2 + $0xa0] sm:$0xff]
    %v1043 = vld [vmem:[#allocation2 + $0xa8] sm:$0xff]
    %v1044 = vld [vmem:[#allocation2 + $0xb0] sm:$0xff]
    %v1045 = vld [vmem:[#allocation2 + $0xb8] sm:$0xff]
    %v1046 = vld [vmem:[#allocation2 + $0xc0] sm:$0xff]
    %v1047 = vld [vmem:[#allocation2 + $0xc8] sm:$0xff]
    %v1048 = vld [vmem:[#allocation2 + $0xd0] sm:$0xff]
    %v1049 = vld [vmem:[#allocation2 + $0xd8] sm:$0xff]
    %v1050 = vld [vmem:[#allocation2 + $0xe0] sm:$0xff]
    %v1051 = vld [vmem:[#allocation2 + $0xe8] sm:$0xff]
    %v1052 = vld [vmem:[#allocation2 + $0xf0] sm:$0xff]
    %v1053 = vld [vmem:[#allocation2 + $0xf8] sm:$0xff]
    %v1054 = vld [vmem:[#allocation2 + $0x100] sm:$0xff]
    %v1055 = vld [vmem:[#allocation2 + $0x108] sm:$0xff]
    %v1056 = vld [vmem:[#allocation2 + $0x110] sm:$0xff]
    %v1057 = vld [vmem:[#allocation2 + $0x118] sm:$0xff]
    %v1058 = vld [vmem:[#allocation2 + $0x120] sm:$0xff]
    %v1059 = vld [vmem:[#allocation2 + $0x128] sm:$0xff]
    %v1060 = vld [vmem:[#allocation2 + $0x130] sm:$0xff]
    %v1061 = vld [vmem:[#allocation2 + $0x138] sm:$0xff]
    %v1062 = vld [vmem:[#allocation2 + $0x140] sm:$0xff]
    %v1063 = vld [vmem:[#allocation2 + $0x148] sm:$0xff]
    %v1064 = vld [vmem:[#allocation2 + $0x150] sm:$0xff]
    %v1065 = vld [vmem:[#allocation2 + $0x158] sm:$0xff]
    %v1066 = vld [vmem:[#allocation2 + $0x160] sm:$0xff]
    %v1067 = vld [vmem:[#allocation2 + $0x168] sm:$0xff]
    %v1068 = vld [vmem:[#allocation2 + $0x170] sm:$0xff]
    %v1069 = vld [vmem:[#allocation2 + $0x178] sm:$0xff]
    %v1070 = vld [vmem:[#allocation2 + $0x180] sm:$0xff]
    %v1071 = vld [vmem:[#allocation2 + $0x188] sm:$0xff]
    %v1072 = vld [vmem:[#allocation2 + $0x190] sm:$0xff]
    %v1073 = vld [vmem:[#allocation2 + $0x198] sm:$0xff]
    %v1074 = vld [vmem:[#allocation2 + $0x1a0] sm:$0xff]
    %v1075 = vld [vmem:[#allocation2 + $0x1a8] sm:$0xff]
    %v1076 = vld [vmem:[#allocation2 + $0x1b0] sm:$0xff]
    %v1077 = vld [vmem:[#allocation2 + $0x1b8] sm:$0xff]
    %v1078 = vld [vmem:[#allocation2 + $0x1c0] sm:$0xff]
    %v1079 = vld [vmem:[#allocation2 + $0x1c8] sm:$0xff]
    %v1080 = vld [vmem:[#allocation2 + $0x1d0] sm:$0xff]
    %v1081 = vld [vmem:[#allocation2 + $0x1d8] sm:$0xff]
    %v1082 = vld [vmem:[#allocation2 + $0x1e0] sm:$0xff]
    %v1083 = vld [vmem:[#allocation2 + $0x1e8] sm:$0xff]
    %v1084 = vld [vmem:[#allocation2 + $0x1f0] sm:$0xff]
    %v1085 = vld [vmem:[#allocation2 + $0x1f8] sm:$0xff]
    %v1086 = vld [vmem:[#allocation9] sm:$0xf]
    %v1087 = vld [vmem:[#allocation9 + $0x4] sm:$0xf]
    %v1088 = vld [vmem:[#allocation9 + $0x8] sm:$0xf]
    %v1089 = vld [vmem:[#allocation9 + $0xc] sm:$0xf]
    %v1090 = vld [vmem:[#allocation9 + $0x10] sm:$0xf]
    %v1091 = vld [vmem:[#allocation9 + $0x14] sm:$0xf]
    %v1092 = vld [vmem:[#allocation9 + $0x18] sm:$0xf]
    %v1093 = vld [vmem:[#allocation9 + $0x1c] sm:$0xf]
    %v1094 = vld [vmem:[#allocation9 + $0x20] sm:$0xf]
    %v1095 = vld [vmem:[#allocation9 + $0x24] sm:$0xf]
    %v1096 = vld [vmem:[#allocation9 + $0x28] sm:$0xf]
    %v1097 = vld [vmem:[#allocation9 + $0x2c] sm:$0xf]
    %v1098 = vld [vmem:[#allocation9 + $0x30] sm:$0xf]
    %v1099 = vld [vmem:[#allocation9 + $0x34] sm:$0xf]
    %v1100 = vld [vmem:[#allocation9 + $0x38] sm:$0xf]
    %v1101 = vld [vmem:[#allocation9 + $0x3c] sm:$0xf]
    %v1102 = vld [vmem:[#allocation9 + $0x40] sm:$0xf]
    %v1103 = vld [vmem:[#allocation9 + $0x44] sm:$0xf]
    %v1104 = vld [vmem:[#allocation9 + $0x48] sm:$0xf]
    %v1105 = vld [vmem:[#allocation9 + $0x4c] sm:$0xf]
    %v1106 = vld [vmem:[#allocation9 + $0x50] sm:$0xf]
    %v1107 = vld [vmem:[#allocation9 + $0x54] sm:$0xf]
    %v1108 = vld [vmem:[#allocation9 + $0x58] sm:$0xf]
    %v1109 = vld [vmem:[#allocation9 + $0x5c] sm:$0xf]
    %v1110 = vld [vmem:[#allocation9 + $0x60] sm:$0xf]
    %v1111 = vld [vmem:[#allocation9 + $0x64] sm:$0xf]
    %v1112 = vld [vmem:[#allocation9 + $0x68] sm:$0xf]
    %v1113 = vld [vmem:[#allocation9 + $0x6c] sm:$0xf]
    %v1114 = vld [vmem:[#allocation9 + $0x70] sm:$0xf]
    %v1115 = vld [vmem:[#allocation9 + $0x74] sm:$0xf]
    %v1116 = vld [vmem:[#allocation9 + $0x78] sm:$0xf]
    %v1117 = vld [vmem:[#allocation9 + $0x7c] sm:$0xf]
    %v1118 = vld [vmem:[%s8] sm:$0xff]
    %v1119 = vld [vmem:[%s8 + $0x8] sm:$0xff]
    %v1120 = vld [vmem:[%s9] sm:$0x1]
    %v1121 = vld [vmem:[%s10] sm:$0x1]
    %v1122 = vunpack.c.l.bf16 %v1022
    %v1123 = vunpack.c.h.bf16 %v1022
    %v1124 = vunpack.c.l.bf16 %v1023
    %v1125 = vunpack.c.h.bf16 %v1023
    %v1126 = vunpack.c.l.bf16 %v1024
    %v1127 = vunpack.c.h.bf16 %v1024
    %v1128 = vunpack.c.l.bf16 %v1025
    %v1129 = vunpack.c.h.bf16 %v1025
    %v1130 = vunpack.c.l.bf16 %v1026
    %v1131 = vunpack.c.h.bf16 %v1026
    %v1132 = vunpack.c.l.bf16 %v1027
    %v1133 = vunpack.c.h.bf16 %v1027
    %v1134 = vunpack.c.l.bf16 %v1028
    %v1135 = vunpack.c.h.bf16 %v1028
    %v1136 = vunpack.c.l.bf16 %v1029
    %v1137 = vunpack.c.h.bf16 %v1029
    %v1138 = vunpack.c.l.bf16 %v1030
    %v1139 = vunpack.c.h.bf16 %v1030
    %v1140 = vunpack.c.l.bf16 %v1031
    %v1141 = vunpack.c.h.bf16 %v1031
    %v1142 = vunpack.c.l.bf16 %v1032
    %v1143 = vunpack.c.h.bf16 %v1032
    %v1144 = vunpack.c.l.bf16 %v1033
    %v1145 = vunpack.c.h.bf16 %v1033
    %v1146 = vunpack.c.l.bf16 %v1034
    %v1147 = vunpack.c.h.bf16 %v1034
    %v1148 = vunpack.c.l.bf16 %v1035
    %v1149 = vunpack.c.h.bf16 %v1035
    %v1150 = vunpack.c.l.bf16 %v1036
    %v1151 = vunpack.c.h.bf16 %v1036
    %v1152 = vunpack.c.l.bf16 %v1037
    %v1153 = vunpack.c.h.bf16 %v1037
    %v1154 = vunpack.c.l.bf16 %v1038
    %v1155 = vunpack.c.h.bf16 %v1038
    %v1156 = vunpack.c.l.bf16 %v1039
    %v1157 = vunpack.c.h.bf16 %v1039
    %v1158 = vunpack.c.l.bf16 %v1040
    %v1159 = vunpack.c.h.bf16 %v1040
    %v1160 = vunpack.c.l.bf16 %v1041
    %v1161 = vunpack.c.h.bf16 %v1041
    %v1162 = vunpack.c.l.bf16 %v1042
    %v1163 = vunpack.c.h.bf16 %v1042
    %v1164 = vunpack.c.l.bf16 %v1043
    %v1165 = vunpack.c.h.bf16 %v1043
    %v1166 = vunpack.c.l.bf16 %v1044
    %v1167 = vunpack.c.h.bf16 %v1044
    %v1168 = vunpack.c.l.bf16 %v1045
    %v1169 = vunpack.c.h.bf16 %v1045
    %v1170 = vunpack.c.l.bf16 %v1046
    %v1171 = vunpack.c.h.bf16 %v1046
    %v1172 = vunpack.c.l.bf16 %v1047
    %v1173 = vunpack.c.h.bf16 %v1047
    %v1174 = vunpack.c.l.bf16 %v1048
    %v1175 = vunpack.c.h.bf16 %v1048
    %v1176 = vunpack.c.l.bf16 %v1049
    %v1177 = vunpack.c.h.bf16 %v1049
    %v1178 = vunpack.c.l.bf16 %v1050
    %v1179 = vunpack.c.h.bf16 %v1050
    %v1180 = vunpack.c.l.bf16 %v1051
    %v1181 = vunpack.c.h.bf16 %v1051
    %v1182 = vunpack.c.l.bf16 %v1052
    %v1183 = vunpack.c.h.bf16 %v1052
    %v1184 = vunpack.c.l.bf16 %v1053
    %v1185 = vunpack.c.h.bf16 %v1053
    %v1186 = vunpack.c.l.bf16 %v1054
    %v1187 = vunpack.c.h.bf16 %v1054
    %v1188 = vunpack.c.l.bf16 %v1055
    %v1189 = vunpack.c.h.bf16 %v1055
    %v1190 = vunpack.c.l.bf16 %v1056
    %v1191 = vunpack.c.h.bf16 %v1056
    %v1192 = vunpack.c.l.bf16 %v1057
    %v1193 = vunpack.c.h.bf16 %v1057
    %v1194 = vunpack.c.l.bf16 %v1058
    %v1195 = vunpack.c.h.bf16 %v1058
    %v1196 = vunpack.c.l.bf16 %v1059
    %v1197 = vunpack.c.h.bf16 %v1059
    %v1198 = vunpack.c.l.bf16 %v1060
    %v1199 = vunpack.c.h.bf16 %v1060
    %v1200 = vunpack.c.l.bf16 %v1061
    %v1201 = vunpack.c.h.bf16 %v1061
    %v1202 = vunpack.c.l.bf16 %v1062
    %v1203 = vunpack.c.h.bf16 %v1062
    %v1204 = vunpack.c.l.bf16 %v1063
    %v1205 = vunpack.c.h.bf16 %v1063
    %v1206 = vunpack.c.l.bf16 %v1064
    %v1207 = vunpack.c.h.bf16 %v1064
    %v1208 = vunpack.c.l.bf16 %v1065
    %v1209 = vunpack.c.h.bf16 %v1065
    %v1210 = vunpack.c.l.bf16 %v1066
    %v1211 = vunpack.c.h.bf16 %v1066
    %v1212 = vunpack.c.l.bf16 %v1067
    %v1213 = vunpack.c.h.bf16 %v1067
    %v1214 = vunpack.c.l.bf16 %v1068
    %v1215 = vunpack.c.h.bf16 %v1068
    %v1216 = vunpack.c.l.bf16 %v1069
    %v1217 = vunpack.c.h.bf16 %v1069
    %v1218 = vunpack.c.l.bf16 %v1070
    %v1219 = vunpack.c.h.bf16 %v1070
    %v1220 = vunpack.c.l.bf16 %v1071
    %v1221 = vunpack.c.h.bf16 %v1071
    %v1222 = vunpack.c.l.bf16 %v1072
    %v1223 = vunpack.c.h.bf16 %v1072
    %v1224 = vunpack.c.l.bf16 %v1073
    %v1225 = vunpack.c.h.bf16 %v1073
    %v1226 = vunpack.c.l.bf16 %v1074
    %v1227 = vunpack.c.h.bf16 %v1074
    %v1228 = vunpack.c.l.bf16 %v1075
    %v1229 = vunpack.c.h.bf16 %v1075
    %v1230 = vunpack.c.l.bf16 %v1076
    %v1231 = vunpack.c.h.bf16 %v1076
    %v1232 = vunpack.c.l.bf16 %v1077
    %v1233 = vunpack.c.h.bf16 %v1077
    %v1234 = vunpack.c.l.bf16 %v1078
    %v1235 = vunpack.c.h.bf16 %v1078
    %v1236 = vunpack.c.l.bf16 %v1079
    %v1237 = vunpack.c.h.bf16 %v1079
    %v1238 = vunpack.c.l.bf16 %v1080
    %v1239 = vunpack.c.h.bf16 %v1080
    %v1240 = vunpack.c.l.bf16 %v1081
    %v1241 = vunpack.c.h.bf16 %v1081
    %v1242 = vunpack.c.l.bf16 %v1082
    %v1243 = vunpack.c.h.bf16 %v1082
    %v1244 = vunpack.c.l.bf16 %v1083
    %v1245 = vunpack.c.h.bf16 %v1083
    %v1246 = vunpack.c.l.bf16 %v1084
    %v1247 = vunpack.c.h.bf16 %v1084
    %v1248 = vunpack.c.l.bf16 %v1085
    %v1249 = vunpack.c.h.bf16 %v1085
    %v1250 = vunpack.c.l.bf16 %v1086
    %v1251 = vunpack.c.l.bf16 %v1087
    %v1252 = vunpack.c.l.bf16 %v1088
    %v1253 = vunpack.c.l.bf16 %v1089
    %v1254 = vunpack.c.l.bf16 %v1090
    %v1255 = vunpack.c.l.bf16 %v1091
    %v1256 = vunpack.c.l.bf16 %v1092
    %v1257 = vunpack.c.l.bf16 %v1093
    %v1258 = vunpack.c.l.bf16 %v1094
    %v1259 = vunpack.c.l.bf16 %v1095
    %v1260 = vunpack.c.l.bf16 %v1096
    %v1261 = vunpack.c.l.bf16 %v1097
    %v1262 = vunpack.c.l.bf16 %v1098
    %v1263 = vunpack.c.l.bf16 %v1099
    %v1264 = vunpack.c.l.bf16 %v1100
    %v1265 = vunpack.c.l.bf16 %v1101
    %v1266 = vunpack.c.l.bf16 %v1102
    %v1267 = vunpack.c.l.bf16 %v1103
    %v1268 = vunpack.c.l.bf16 %v1104
    %v1269 = vunpack.c.l.bf16 %v1105
    %v1270 = vunpack.c.l.bf16 %v1106
    %v1271 = vunpack.c.l.bf16 %v1107
    %v1272 = vunpack.c.l.bf16 %v1108
    %v1273 = vunpack.c.l.bf16 %v1109
    %v1274 = vunpack.c.l.bf16 %v1110
    %v1275 = vunpack.c.l.bf16 %v1111
    %v1276 = vunpack.c.l.bf16 %v1112
    %v1277 = vunpack.c.l.bf16 %v1113
    %v1278 = vunpack.c.l.bf16 %v1114
    %v1279 = vunpack.c.l.bf16 %v1115
    %v1280 = vunpack.c.l.bf16 %v1116
    %v1281 = vunpack.c.l.bf16 %v1117
    %v1282 = vunpack.c.l.bf16 %v1118
    %v1283 = vunpack.c.h.bf16 %v1118
    %v1284 = vunpack.c.l.bf16 %v1119
    %v1285 = vunpack.c.h.bf16 %v1119
    %1286 = vmatprep.subr.mxu0 %v1153
    %1287 = vmatpush1.msra.mxu0 %v1152
    %1288 = vmatprep.subr.mxu0 %v1151
    %1289 = vmatpush1.msra.mxu0 %v1150
    %1290 = vmatprep.subr.mxu0 %v1149
    %1291 = vmatpush1.msra.mxu0 %v1148
    %1292 = vmatprep.subr.mxu0 %v1147
    %1293 = vmatpush1.msra.mxu0 %v1146
    %1294 = vmatprep.subr.mxu0 %v1145
    %1295 = vmatpush1.msra.mxu0 %v1144
    %1296 = vmatprep.subr.mxu0 %v1143
    %1297 = vmatpush1.msra.mxu0 %v1142
    %1298 = vmatprep.subr.mxu0 %v1141
    %1299 = vmatpush1.msra.mxu0 %v1140
    %1300 = vmatprep.subr.mxu0 %v1139
    %1301 = vmatpush1.msra.mxu0 %v1138
    %1302 = vmatprep.subr.mxu0 %v1137
    %1303 = vmatpush1.msra.mxu0 %v1136
    %1304 = vmatprep.subr.mxu0 %v1135
    %1305 = vmatpush1.msra.mxu0 %v1134
    %1306 = vmatprep.subr.mxu0 %v1133
    %1307 = vmatpush1.msra.mxu0 %v1132
    %1308 = vmatprep.subr.mxu0 %v1131
    %1309 = vmatpush1.msra.mxu0 %v1130
    %1310 = vmatprep.subr.mxu0 %v1129
    %1311 = vmatpush1.msra.mxu0 %v1128
    %1312 = vmatprep.subr.mxu0 %v1127
    %1313 = vmatpush1.msra.mxu0 %v1126
    %1314 = vmatprep.subr.mxu0 %v1125
    %1315 = vmatpush1.msra.mxu0 %v1124
    %1316 = vmatprep.subr.mxu0 %v1123
    %1317 = vmatpush1.msra.mxu0 %v1122
    %1318 = vmatprep.subr.mxu0 %v1185
    %1319 = vmatpush2.msra.mxu0 %v1184
    %1320 = vmatprep.subr.mxu0 %v1183
    %1321 = vmatpush2.msra.mxu0 %v1182
    %1322 = vmatprep.subr.mxu0 %v1181
    %1323 = vmatpush2.msra.mxu0 %v1180
    %1324 = vmatprep.subr.mxu0 %v1179
    %1325 = vmatpush2.msra.mxu0 %v1178
    %1326 = vmatprep.subr.mxu0 %v1177
    %1327 = vmatpush2.msra.mxu0 %v1176
    %1328 = vmatprep.subr.mxu0 %v1175
    %1329 = vmatpush2.msra.mxu0 %v1174
    %1330 = vmatprep.subr.mxu0 %v1173
    %1331 = vmatpush2.msra.mxu0 %v1172
    %1332 = vmatprep.subr.mxu0 %v1171
    %1333 = vmatpush2.msra.mxu0 %v1170
    %1334 = vmatprep.subr.mxu0 %v1169
    %1335 = vmatpush2.msra.mxu0 %v1168
    %1336 = vmatprep.subr.mxu0 %v1167
    %1337 = vmatpush2.msra.mxu0 %v1166
    %1338 = vmatprep.subr.mxu0 %v1165
    %1339 = vmatpush2.msra.mxu0 %v1164
    %1340 = vmatprep.subr.mxu0 %v1163
    %1341 = vmatpush2.msra.mxu0 %v1162
    %1342 = vmatprep.subr.mxu0 %v1161
    %1343 = vmatpush2.msra.mxu0 %v1160
    %1344 = vmatprep.subr.mxu0 %v1159
    %1345 = vmatpush2.msra.mxu0 %v1158
    %1346 = vmatprep.subr.mxu0 %v1157
    %1347 = vmatpush2.msra.mxu0 %v1156
    %1348 = vmatprep.subr.mxu0 %v1155
    %1349 = vmatpush2.msra.mxu0 %v1154
    %1350 = vmatprep.mubr.f32.mxu0 %v1015
    %1351 = vmatmul.mubr.f32.gmra.mxu0 %v1014
    %v1352 = vpop.f32.mrf.mxu0
    %v1353 = vadd.f32 0.0, %v1352
    %v1354 = vpop.f32.mrf.mxu0
    %v1355 = vadd.f32 0.0, %v1354
    %1356 = vdwg.mxu0
    %1357 = vmatprep.subr.mxu0 %v1217
    %1358 = vmatpush1.msra.mxu0 %v1216
    %1359 = vmatprep.subr.mxu0 %v1215
    %1360 = vmatpush1.msra.mxu0 %v1214
    %1361 = vmatprep.subr.mxu0 %v1213
    %1362 = vmatpush1.msra.mxu0 %v1212
    %1363 = vmatprep.subr.mxu0 %v1211
    %1364 = vmatpush1.msra.mxu0 %v1210
    %1365 = vmatprep.subr.mxu0 %v1209
    %1366 = vmatpush1.msra.mxu0 %v1208
    %1367 = vmatprep.subr.mxu0 %v1207
    %1368 = vmatpush1.msra.mxu0 %v1206
    %1369 = vmatprep.subr.mxu0 %v1205
    %1370 = vmatpush1.msra.mxu0 %v1204
    %1371 = vmatprep.subr.mxu0 %v1203
    %1372 = vmatpush1.msra.mxu0 %v1202
    %1373 = vmatprep.subr.mxu0 %v1201
    %1374 = vmatpush1.msra.mxu0 %v1200
    %1375 = vmatprep.subr.mxu0 %v1199
    %1376 = vmatpush1.msra.mxu0 %v1198
    %1377 = vmatprep.subr.mxu0 %v1197
    %1378 = vmatpush1.msra.mxu0 %v1196
    %1379 = vmatprep.subr.mxu0 %v1195
    %1380 = vmatpush1.msra.mxu0 %v1194
    %1381 = vmatprep.subr.mxu0 %v1193
    %1382 = vmatpush1.msra.mxu0 %v1192
    %1383 = vmatprep.subr.mxu0 %v1191
    %1384 = vmatpush1.msra.mxu0 %v1190
    %1385 = vmatprep.subr.mxu0 %v1189
    %1386 = vmatpush1.msra.mxu0 %v1188
    %1387 = vmatprep.subr.mxu0 %v1187
    %1388 = vmatpush1.msra.mxu0 %v1186
    %1389 = vmatprep.subr.mxu0 %v1249
    %1390 = vmatpush2.msra.mxu0 %v1248
    %1391 = vmatprep.subr.mxu0 %v1247
    %1392 = vmatpush2.msra.mxu0 %v1246
    %1393 = vmatprep.subr.mxu0 %v1245
    %1394 = vmatpush2.msra.mxu0 %v1244
    %1395 = vmatprep.subr.mxu0 %v1243
    %1396 = vmatpush2.msra.mxu0 %v1242
    %1397 = vmatprep.subr.mxu0 %v1241
    %1398 = vmatpush2.msra.mxu0 %v1240
    %1399 = vmatprep.subr.mxu0 %v1239
    %1400 = vmatpush2.msra.mxu0 %v1238
    %1401 = vmatprep.subr.mxu0 %v1237
    %1402 = vmatpush2.msra.mxu0 %v1236
    %1403 = vmatprep.subr.mxu0 %v1235
    %1404 = vmatpush2.msra.mxu0 %v1234
    %1405 = vmatprep.subr.mxu0 %v1233
    %1406 = vmatpush2.msra.mxu0 %v1232
    %1407 = vmatprep.subr.mxu0 %v1231
    %1408 = vmatpush2.msra.mxu0 %v1230
    %1409 = vmatprep.subr.mxu0 %v1229
    %1410 = vmatpush2.msra.mxu0 %v1228
    %1411 = vmatprep.subr.mxu0 %v1227
    %1412 = vmatpush2.msra.mxu0 %v1226
    %1413 = vmatprep.subr.mxu0 %v1225
    %1414 = vmatpush2.msra.mxu0 %v1224
    %1415 = vmatprep.subr.mxu0 %v1223
    %1416 = vmatpush2.msra.mxu0 %v1222
    %1417 = vmatprep.subr.mxu0 %v1221
    %1418 = vmatpush2.msra.mxu0 %v1220
    %1419 = vmatprep.subr.mxu0 %v1219
    %1420 = vmatpush2.msra.mxu0 %v1218
    %1421 = vmatprep.mubr.f32.mxu0 %v1017
    %1422 = vmatmul.mubr.f32.gmra.mxu0 %v1016
    %v1423 = vpop.f32.mrf.mxu0
    %v1424 = vadd.f32 %v1353, %v1423
    %v1425 = vpop.f32.mrf.mxu0
    %v1426 = vadd.f32 %v1355, %v1425
    %1427 = vdwg.mxu0
    %v1428 = vsel %vm586, %v1424, 0.0
    %v1429 = vrot.slane %v1428, 4
    %v1430 = vadd.f32 %v1428, %v1429
    %v1431 = vrot.slane %v1430, 2
    %v1432 = vadd.f32 %v1430, %v1431
    %v1433 = vrot.slane %v1432, 1
    %v1434 = vadd.f32 %v1432, %v1433
    %v1435 = vsel %vm586, %v1426, 0.0
    %v1436 = vrot.slane %v1435, 4
    %v1437 = vadd.f32 %v1435, %v1436
    %v1438 = vrot.slane %v1437, 2
    %v1439 = vadd.f32 %v1437, %v1438
    %v1440 = vrot.slane %v1439, 1
    %v1441 = vadd.f32 %v1439, %v1440
    %v1442 = vmul.f32 %v1424, %v1424
    %v1443 = vmul.f32 %v1426, %v1426
    %v1444 = vsel %vm586, %v1442, 0.0
    %v1445 = vrot.slane %v1444, 4
    %v1446 = vadd.f32 %v1444, %v1445
    %v1447 = vrot.slane %v1446, 2
    %v1448 = vadd.f32 %v1446, %v1447
    %v1449 = vrot.slane %v1448, 1
    %v1450 = vadd.f32 %v1448, %v1449
    %v1451 = vsel %vm586, %v1443, 0.0
    %v1452 = vrot.slane %v1451, 4
    %v1453 = vadd.f32 %v1451, %v1452
    %v1454 = vrot.slane %v1453, 2
    %v1455 = vadd.f32 %v1453, %v1454
    %v1456 = vrot.slane %v1455, 1
    %v1457 = vadd.f32 %v1455, %v1456
    %v1458 = vsel %vm647, %v1434, %v1450
    %v1459 = vsel %vm647, %v1441, %v1457
    %1460 = vmatprep.subr.mxu0 0.0
    %1461 = vmatpush1.msra.mxu0 %v1265
    %1462 = vmatprep.subr.mxu0 0.0
    %1463 = vmatpush1.msra.mxu0 %v1264
    %1464 = vmatprep.subr.mxu0 0.0
    %1465 = vmatpush1.msra.mxu0 %v1263
    %1466 = vmatprep.subr.mxu0 0.0
    %1467 = vmatpush1.msra.mxu0 %v1262
    %1468 = vmatprep.subr.mxu0 0.0
    %1469 = vmatpush1.msra.mxu0 %v1261
    %1470 = vmatprep.subr.mxu0 0.0
    %1471 = vmatpush1.msra.mxu0 %v1260
    %1472 = vmatprep.subr.mxu0 0.0
    %1473 = vmatpush1.msra.mxu0 %v1259
    %1474 = vmatprep.subr.mxu0 0.0
    %1475 = vmatpush1.msra.mxu0 %v1258
    %1476 = vmatprep.subr.mxu0 0.0
    %1477 = vmatpush1.msra.mxu0 %v1257
    %1478 = vmatprep.subr.mxu0 0.0
    %1479 = vmatpush1.msra.mxu0 %v1256
    %1480 = vmatprep.subr.mxu0 0.0
    %1481 = vmatpush1.msra.mxu0 %v1255
    %1482 = vmatprep.subr.mxu0 0.0
    %1483 = vmatpush1.msra.mxu0 %v1254
    %1484 = vmatprep.subr.mxu0 0.0
    %1485 = vmatpush1.msra.mxu0 %v1253
    %1486 = vmatprep.subr.mxu0 0.0
    %1487 = vmatpush1.msra.mxu0 %v1252
    %1488 = vmatprep.subr.mxu0 0.0
    %1489 = vmatpush1.msra.mxu0 %v1251
    %1490 = vmatprep.subr.mxu0 0.0
    %1491 = vmatpush1.msra.mxu0 %v1250
    %1492 = vmatprep.subr.mxu0 0.0
    %1493 = vmatpush2.msra.mxu0 %v1281
    %1494 = vmatprep.subr.mxu0 0.0
    %1495 = vmatpush2.msra.mxu0 %v1280
    %1496 = vmatprep.subr.mxu0 0.0
    %1497 = vmatpush2.msra.mxu0 %v1279
    %1498 = vmatprep.subr.mxu0 0.0
    %1499 = vmatpush2.msra.mxu0 %v1278
    %1500 = vmatprep.subr.mxu0 0.0
    %1501 = vmatpush2.msra.mxu0 %v1277
    %1502 = vmatprep.subr.mxu0 0.0
    %1503 = vmatpush2.msra.mxu0 %v1276
    %1504 = vmatprep.subr.mxu0 0.0
    %1505 = vmatpush2.msra.mxu0 %v1275
    %1506 = vmatprep.subr.mxu0 0.0
    %1507 = vmatpush2.msra.mxu0 %v1274
    %1508 = vmatprep.subr.mxu0 0.0
    %1509 = vmatpush2.msra.mxu0 %v1273
    %1510 = vmatprep.subr.mxu0 0.0
    %1511 = vmatpush2.msra.mxu0 %v1272
    %1512 = vmatprep.subr.mxu0 0.0
    %1513 = vmatpush2.msra.mxu0 %v1271
    %1514 = vmatprep.subr.mxu0 0.0
    %1515 = vmatpush2.msra.mxu0 %v1270
    %1516 = vmatprep.subr.mxu0 0.0
    %1517 = vmatpush2.msra.mxu0 %v1269
    %1518 = vmatprep.subr.mxu0 0.0
    %1519 = vmatpush2.msra.mxu0 %v1268
    %1520 = vmatprep.subr.mxu0 0.0
    %1521 = vmatpush2.msra.mxu0 %v1267
    %1522 = vmatprep.subr.mxu0 0.0
    %1523 = vmatpush2.msra.mxu0 %v1266
    %1524 = vmatprep.mubr.f32.mxu0 %v1459
    %1525 = vmatmul.mubr.f32.gmra.mxu0 %v1458
    %v1526 = vpop.f32.mrf.mxu0
    %v1527 = vadd.f32 0.0, %v1526
    %v1528 = vpop.f32.mrf.mxu0
    %1529 = vdwg.mxu0
    %v1530 = vmul.f32 %v1527, 0.03125
    %v1531 = vmul.f32 %v1530, %v1530
    %v1533 = vrot.slane %v1531, 7
    %v1535 = vsub.f32 %v1530, %v1533
    %v1536 = vmax.f32 %v1535, 0.0
    %v1537 = vadd.f32 %v1536, 1e-05
    %v1538 = vrsqrt.pop %v1537
    %v1541 = vunpack.c.l.s4 1966171168
    %v1542 = vunpack.c.0.s8 %v1541
    %v1543 = vlaneseq
    %v1544 = vshrl.u32 %v1543, 7
    %v1545 = vsub.s32 %v1542, %v1544
    %v1546 = vrot.slane %v1538, %v1545
    %v1547 = vcombine.high %v1546, %v1546
    %v1549 = vunpack.c.l.s4 1966171168
    %v1550 = vunpack.c.0.s8 %v1549
    %v1551 = vlaneseq
    %v1552 = vshrl.u32 %v1551, 7
    %v1553 = vsub.s32 %v1550, %v1552
    %v1554 = vrot.slane %v1547, %v1553
    %v1556 = vmul.f32 %v1120, %v1554
    %v1557 = vmul.f32 %v1530, %v1556
    %v1558 = vsub.f32 %v1121, %v1557
    %v1560 = vlaneseq
    %v1561 = vshrl.u32 %v1560, 7
    %v1562 = vsub.s32 0, %v1561
    %v1563 = vrot.slane %v1558, %v1562
    %v1565 = vsel %vm647, %v1556, %v1563
    %vm1566 = vcmask 130048
    %v1568 = vsel %vm1566, %v1565, 0
    %1570 = vmatprep.subr.mxu0 0.0
    %1571 = vmatpush1.msra.mxu0 0.0
    %1572 = vmatprep.subr.mxu0 0.0
    %1573 = vmatpush1.msra.mxu0 0.0
    %1574 = vmatprep.subr.mxu0 0.0
    %1575 = vmatpush1.msra.mxu0 0.0
    %1576 = vmatprep.subr.mxu0 0.0
    %1577 = vmatpush1.msra.mxu0 0.0
    %1578 = vmatprep.subr.mxu0 0.0
    %1579 = vmatpush1.msra.mxu0 0.0
    %1580 = vmatprep.subr.mxu0 0.0
    %1581 = vmatpush1.msra.mxu0 0.0
    %1582 = vmatprep.subr.mxu0 0.0
    %1583 = vmatpush1.msra.mxu0 0.0
    %1584 = vmatprep.subr.mxu0 0.0
    %1585 = vmatpush1.msra.mxu0 0.0
    %1586 = vmatprep.subr.mxu0 0.0
    %1587 = vmatpush1.msra.mxu0 0.0
    %1588 = vmatprep.subr.mxu0 0.0
    %1589 = vmatpush1.msra.mxu0 0.0
    %1590 = vmatprep.subr.mxu0 0.0
    %1591 = vmatpush1.msra.mxu0 0.0
    %1592 = vmatprep.subr.mxu0 0.0
    %1593 = vmatpush1.msra.mxu0 0.0
    %1594 = vmatprep.subr.mxu0 0.0
    %1595 = vmatpush1.msra.mxu0 0.0
    %1596 = vmatprep.subr.mxu0 0.0
    %1597 = vmatpush1.msra.mxu0 0.0
    %1598 = vmatprep.subr.mxu0 %v1285
    %1599 = vmatpush1.msra.mxu0 %v1284
    %1600 = vmatprep.subr.mxu0 %v1283
    %1601 = vmatpush1.msra.mxu0 %v1282
    %1602 = vmatprep.subr.mxu0 0.0
    %1603 = vmatpush2.msra.mxu0 0.0
    %1604 = vmatprep.subr.mxu0 0.0
    %1605 = vmatpush2.msra.mxu0 0.0
    %1606 = vmatprep.subr.mxu0 0.0
    %1607 = vmatpush2.msra.mxu0 0.0
    %1608 = vmatprep.subr.mxu0 0.0
    %1609 = vmatpush2.msra.mxu0 0.0
    %1610 = vmatprep.subr.mxu0 0.0
    %1611 = vmatpush2.msra.mxu0 0.0
    %1612 = vmatprep.subr.mxu0 0.0
    %1613 = vmatpush2.msra.mxu0 0.0
    %1614 = vmatprep.subr.mxu0 0.0
    %1615 = vmatpush2.msra.mxu0 0.0
    %1616 = vmatprep.subr.mxu0 0.0
    %1617 = vmatpush2.msra.mxu0 0.0
    %1618 = vmatprep.subr.mxu0 0.0
    %1619 = vmatpush2.msra.mxu0 0.0
    %1620 = vmatprep.subr.mxu0 0.0
    %1621 = vmatpush2.msra.mxu0 0.0
    %1622 = vmatprep.subr.mxu0 0.0
    %1623 = vmatpush2.msra.mxu0 0.0
    %1624 = vmatprep.subr.mxu0 0.0
    %1625 = vmatpush2.msra.mxu0 0.0
    %1626 = vmatprep.subr.mxu0 0.0
    %1627 = vmatpush2.msra.mxu0 0.0
    %1628 = vmatprep.subr.mxu0 0.0
    %1629 = vmatpush2.msra.mxu0 0.0
    %1630 = vmatprep.subr.mxu0 0.0
    %1631 = vmatpush2.msra.mxu0 0.0
    %1632 = vmatprep.subr.mxu0 0.0
    %1633 = vmatpush2.msra.mxu0 0.0
    %1634 = vmatprep.mubr.f32.mxu0 0.0
    %1635 = vmatmul.mubr.f32.gmra.mxu0 %v1568
    %v1636 = vpop.f32.mrf.mxu0
    %v1637 = vadd.f32 0.0, %v1636
    %v1638 = vpop.f32.mrf.mxu0
    %v1639 = vadd.f32 0.0, %v1638
    %1640 = vdwg.mxu0
    %v1641 = vlaneseq
    %v1642 = vshrl.u32 %v1641, 7
    %v1643 = vsub.s32 0, %v1642
    %v1644 = vrot.slane %v1637, %v1643
    %v1645 = vlaneseq
    %v1646 = vshrl.u32 %v1645, 7
    %v1647 = vsub.s32 0, %v1646
    %v1648 = vrot.slane %v1639, %v1647
    %v1649 = vmul.f32 %v1424, %v1644
    %v1650 = vmul.f32 %v1426, %v1648
    %v1651 = vlaneseq
    %v1652 = vshrl.u32 %v1651, 7
    %v1653 = vsub.s32 1, %v1652
    %v1654 = vrot.slane %v1637, %v1653
    %v1655 = vlaneseq
    %v1656 = vshrl.u32 %v1655, 7
    %v1657 = vsub.s32 1, %v1656
    %v1658 = vrot.slane %v1639, %v1657
    %v1659 = vadd.f32 %v1649, %v1654
    %v1660 = vadd.f32 %v1650, %v1658
    %v1661 = vmax.f32 %v1659, 0.0
    %v1662 = vmax.f32 %v1660, 0.0
    %s1663 = smul.u32 4, 32
    %s1664 = smul.u32 %s1663, 1
    %s1665 = sshll.u32 %s1664, 4
    %1666 = dma.done %s92, %s1665
    %v1667 = vld [vmem:[#allocation3] sm:$0xf]
    %v1668 = vld [vmem:[#allocation3 + $0x4] sm:$0xf]
    %v1669 = vld [vmem:[#allocation3 + $0x8] sm:$0xf]
    %v1670 = vld [vmem:[#allocation3 + $0xc] sm:$0xf]
    %v1671 = vld [vmem:[#allocation3 + $0x10] sm:$0xf]
    %v1672 = vld [vmem:[#allocation3 + $0x14] sm:$0xf]
    %v1673 = vld [vmem:[#allocation3 + $0x18] sm:$0xf]
    %v1674 = vld [vmem:[#allocation3 + $0x1c] sm:$0xf]
    %v1675 = vld [vmem:[#allocation3 + $0x20] sm:$0xf]
    %v1676 = vld [vmem:[#allocation3 + $0x24] sm:$0xf]
    %v1677 = vld [vmem:[#allocation3 + $0x28] sm:$0xf]
    %v1678 = vld [vmem:[#allocation3 + $0x2c] sm:$0xf]
    %v1679 = vld [vmem:[#allocation3 + $0x30] sm:$0xf]
    %v1680 = vld [vmem:[#allocation3 + $0x34] sm:$0xf]
    %v1681 = vld [vmem:[#allocation3 + $0x38] sm:$0xf]
    %v1682 = vld [vmem:[#allocation3 + $0x3c] sm:$0xf]
    %v1683 = vld [vmem:[#allocation3 + $0x40] sm:$0xf]
    %v1684 = vld [vmem:[#allocation3 + $0x44] sm:$0xf]
    %v1685 = vld [vmem:[#allocation3 + $0x48] sm:$0xf]
    %v1686 = vld [vmem:[#allocation3 + $0x4c] sm:$0xf]
    %v1687 = vld [vmem:[#allocation3 + $0x50] sm:$0xf]
    %v1688 = vld [vmem:[#allocation3 + $0x54] sm:$0xf]
    %v1689 = vld [vmem:[#allocation3 + $0x58] sm:$0xf]
    %v1690 = vld [vmem:[#allocation3 + $0x5c] sm:$0xf]
    %v1691 = vld [vmem:[#allocation3 + $0x60] sm:$0xf]
    %v1692 = vld [vmem:[#allocation3 + $0x64] sm:$0xf]
    %v1693 = vld [vmem:[#allocation3 + $0x68] sm:$0xf]
    %v1694 = vld [vmem:[#allocation3 + $0x6c] sm:$0xf]
    %v1695 = vld [vmem:[#allocation3 + $0x70] sm:$0xf]
    %v1696 = vld [vmem:[#allocation3 + $0x74] sm:$0xf]
    %v1697 = vld [vmem:[#allocation3 + $0x78] sm:$0xf]
    %v1698 = vld [vmem:[#allocation3 + $0x7c] sm:$0xf]
    %v1699 = vunpack.c.l.bf16 %v1667
    %v1700 = vunpack.c.l.bf16 %v1668
    %v1701 = vunpack.c.l.bf16 %v1669
    %v1702 = vunpack.c.l.bf16 %v1670
    %v1703 = vunpack.c.l.bf16 %v1671
    %v1704 = vunpack.c.l.bf16 %v1672
    %v1705 = vunpack.c.l.bf16 %v1673
    %v1706 = vunpack.c.l.bf16 %v1674
    %v1707 = vunpack.c.l.bf16 %v1675
    %v1708 = vunpack.c.l.bf16 %v1676
    %v1709 = vunpack.c.l.bf16 %v1677
    %v1710 = vunpack.c.l.bf16 %v1678
    %v1711 = vunpack.c.l.bf16 %v1679
    %v1712 = vunpack.c.l.bf16 %v1680
    %v1713 = vunpack.c.l.bf16 %v1681
    %v1714 = vunpack.c.l.bf16 %v1682
    %v1715 = vunpack.c.l.bf16 %v1683
    %v1716 = vunpack.c.l.bf16 %v1684
    %v1717 = vunpack.c.l.bf16 %v1685
    %v1718 = vunpack.c.l.bf16 %v1686
    %v1719 = vunpack.c.l.bf16 %v1687
    %v1720 = vunpack.c.l.bf16 %v1688
    %v1721 = vunpack.c.l.bf16 %v1689
    %v1722 = vunpack.c.l.bf16 %v1690
    %v1723 = vunpack.c.l.bf16 %v1691
    %v1724 = vunpack.c.l.bf16 %v1692
    %v1725 = vunpack.c.l.bf16 %v1693
    %v1726 = vunpack.c.l.bf16 %v1694
    %v1727 = vunpack.c.l.bf16 %v1695
    %v1728 = vunpack.c.l.bf16 %v1696
    %v1729 = vunpack.c.l.bf16 %v1697
    %v1730 = vunpack.c.l.bf16 %v1698
    %v1731 = vld [vmem:[%s12] sm:$0x1]
    %v1733 = vlaneseq
    %v1734 = vshrl.u32 %v1733, 7
    %v1735 = vsub.s32 0, %v1734
    %v1736 = vrot.slane %v1731, %v1735
    %1738 = vmatprep.subr.mxu0 0.0
    %1739 = vmatpush1.msra.mxu0 %v1714
    %1740 = vmatprep.subr.mxu0 0.0
    %1741 = vmatpush1.msra.mxu0 %v1713
    %1742 = vmatprep.subr.mxu0 0.0
    %1743 = vmatpush1.msra.mxu0 %v1712
    %1744 = vmatprep.subr.mxu0 0.0
    %1745 = vmatpush1.msra.mxu0 %v1711
    %1746 = vmatprep.subr.mxu0 0.0
    %1747 = vmatpush1.msra.mxu0 %v1710
    %1748 = vmatprep.subr.mxu0 0.0
    %1749 = vmatpush1.msra.mxu0 %v1709
    %1750 = vmatprep.subr.mxu0 0.0
    %1751 = vmatpush1.msra.mxu0 %v1708
    %1752 = vmatprep.subr.mxu0 0.0
    %1753 = vmatpush1.msra.mxu0 %v1707
    %1754 = vmatprep.subr.mxu0 0.0
    %1755 = vmatpush1.msra.mxu0 %v1706
    %1756 = vmatprep.subr.mxu0 0.0
    %1757 = vmatpush1.msra.mxu0 %v1705
    %1758 = vmatprep.subr.mxu0 0.0
    %1759 = vmatpush1.msra.mxu0 %v1704
    %1760 = vmatprep.subr.mxu0 0.0
    %1761 = vmatpush1.msra.mxu0 %v1703
    %1762 = vmatprep.subr.mxu0 0.0
    %1763 = vmatpush1.msra.mxu0 %v1702
    %1764 = vmatprep.subr.mxu0 0.0
    %1765 = vmatpush1.msra.mxu0 %v1701
    %1766 = vmatprep.subr.mxu0 0.0
    %1767 = vmatpush1.msra.mxu0 %v1700
    %1768 = vmatprep.subr.mxu0 0.0
    %1769 = vmatpush1.msra.mxu0 %v1699
    %1770 = vmatprep.subr.mxu0 0.0
    %1771 = vmatpush2.msra.mxu0 %v1730
    %1772 = vmatprep.subr.mxu0 0.0
    %1773 = vmatpush2.msra.mxu0 %v1729
    %1774 = vmatprep.subr.mxu0 0.0
    %1775 = vmatpush2.msra.mxu0 %v1728
    %1776 = vmatprep.subr.mxu0 0.0
    %1777 = vmatpush2.msra.mxu0 %v1727
    %1778 = vmatprep.subr.mxu0 0.0
    %1779 = vmatpush2.msra.mxu0 %v1726
    %1780 = vmatprep.subr.mxu0 0.0
    %1781 = vmatpush2.msra.mxu0 %v1725
    %1782 = vmatprep.subr.mxu0 0.0
    %1783 = vmatpush2.msra.mxu0 %v1724
    %1784 = vmatprep.subr.mxu0 0.0
    %1785 = vmatpush2.msra.mxu0 %v1723
    %1786 = vmatprep.subr.mxu0 0.0
    %1787 = vmatpush2.msra.mxu0 %v1722
    %1788 = vmatprep.subr.mxu0 0.0
    %1789 = vmatpush2.msra.mxu0 %v1721
    %1790 = vmatprep.subr.mxu0 0.0
    %1791 = vmatpush2.msra.mxu0 %v1720
    %1792 = vmatprep.subr.mxu0 0.0
    %1793 = vmatpush2.msra.mxu0 %v1719
    %1794 = vmatprep.subr.mxu0 0.0
    %1795 = vmatpush2.msra.mxu0 %v1718
    %1796 = vmatprep.subr.mxu0 0.0
    %1797 = vmatpush2.msra.mxu0 %v1717
    %1798 = vmatprep.subr.mxu0 0.0
    %1799 = vmatpush2.msra.mxu0 %v1716
    %1800 = vmatprep.subr.mxu0 0.0
    %1801 = vmatpush2.msra.mxu0 %v1715
    %1802 = vmatprep.mubr.f32.mxu0 %v1662
    %1803 = vmatmul.mubr.f32.gmra.mxu0 %v1661
    %v1804 = vpop.f32.mrf.mxu0
    %v1805 = vadd.f32 %v1736, %v1804
    %v1806 = vpop.f32.mrf.mxu0
    %1807 = vdwg.mxu0
    %1808 = vst [vmem:[%s13] sm:$0x3] %v1805
    // Predicated region
    $region66: #{_lambda_.1} parent=1 // pred_check
      _
    $region67: #{_lambda_.1} parent=1 // pred_check_branch
      %1810 = sbr.rel (0) target = $region69
    $region68: #{_lambda_.1} parent=1 // pred_region
      _
    $region69: #{_lambda_.1} parent=1 // pred_fallthru
      _
    // Predicated region
    $region70: #{_lambda_.1} parent=1 // pred_check
      _
    $region71: #{_lambda_.1} parent=1 // pred_check_branch
      %1812 = sbr.rel (0) target = $region73
    $region72: #{_lambda_.1} parent=1 // pred_region
      _
    $region73: #{_lambda_.1} parent=1 // pred_fallthru
      _
    %1813 = vsyncpa [#allocation6], 1
    %1814 = vsyncpa [#allocation8], 1
  %1815 = vsyncmov [#allocation4]
  %s1816 = vpop.sfrf %1815
  %p1817 = scmp.eq.s32.totalorder %s1816, 0
  %p1818 = pneg %p1817
  %1820 = shalt.err (%p1818)
  %s1821 = scalar_lea.sflag [#allocation4], 1
  %1822 = vsyncmov %s1821
  %s1823 = vpop.sfrf %1822
  %p1824 = scmp.eq.s32.totalorder %s1823, 0
  %p1825 = pneg %p1824
  %1827 = shalt.err (%p1825)

</llo_original>
